<compile_context>
chip_gen: v7x
topology: tpu7x:2x2x1
jax: 0.10.0
libtpu: 0.0.40
codegen_flags: <defaults>
</compile_context>

<pallas_src>
import jax
import jax.numpy as jnp
from jax.experimental import pallas as pl
from jax.experimental.pallas import tpu as pltpu

# ----------------------------- configuration --------------------------------
LEVELS = 4            # lob_levels
AUX = 3               # aux_features
TIME = 8              # time_depth (timesteps)
BATCH = 2
CONV_A = 8            # conv_channels_a
CONV_B = 8            # conv_channels_b
CONV_C = 8            # conv_channels_c
TRANS = 16            # translation_layer
HIDDEN = 32
NUM_LAYERS = 2        # hidden_features_per_layer = [32, 32] (equal -> vanilla torch LSTM)
STATE = LEVELS * 4 + AUX
LANES = 128           # lane width of the packed weight / bias buffers
_TAIL = 8             # 8-aligned tail slab of the state vector that covers the aux rows

assert (4 * LEVELS) % 8 == 0, "lob feature rows must be 8-aligned for the in-kernel transpose"
assert TIME % 8 == 0, "time depth must be 8-aligned for the in-kernel transpose/merge"
assert AUX <= _TAIL <= STATE
assert 4 * HIDDEN <= LANES and 2 * LEVELS * CONV_A <= LANES


# --------------------------- packed buffer layouts ---------------------------
def _weight_layout(num_layers):
    """Row layout of the single packed bf16 weight buffer: name -> (row0, nrows, ncols).
    Every block starts on an 8-row boundary so in-kernel slices stay sublane-aligned."""
    layout = {}
    off = 0

    def add(name, nrows, ncols):
        nonlocal off
        layout[name] = (off, nrows, ncols)
        off = -(-(off + nrows) // 8) * 8

    add('w1', 4 * LEVELS, 2 * LEVELS * CONV_A)      # conv1 (block-diag over 2L windows)
    add('w2', 2 * LEVELS * CONV_A, LEVELS * CONV_B) # conv2 (block-diag over L windows)
    add('w3', LEVELS * CONV_B, CONV_C)              # conv3 (stacked)
    add('wtc', CONV_C, TRANS)                       # translation (conv part)
    add('wta', _TAIL, TRANS)                        # translation (aux part, zero-padded rows)
    for l in range(num_layers):
        in_f = TRANS if l == 0 else HIDDEN
        add(f'wih{l}', in_f, 4 * HIDDEN)
        add(f'whh{l}', HIDDEN, 4 * HIDDEN)
    add('wout', HIDDEN, 1)
    return layout, off


def _bias_rows(num_layers):
    """Row index of each bias inside the single packed f32 bias buffer."""
    rows = {'b1': 0, 'b2': 1, 'b3': 2, 'bt': 3}
    for l in range(num_layers):
        rows[f'bg{l}'] = 4 + l
    rows['bout'] = 4 + num_layers
    total = -(-(5 + num_layers) // 8) * 8
    return rows, total


# ------------------------------- shared math ----------------------------------
def _forward_math(lob_slab, tail_slab, wget, bias, num_layers):
    """Forward math shared by the Pallas kernel and the numerics-matched reference.

    lob_slab:  [B, 4*LEVELS, T] f32 (price/volume LOB rows of the state)
    tail_slab: [B, _TAIL, T]    f32 (last _TAIL state rows; covers the aux features)
    wget(name): bf16 weight block from the packed buffer
    bias:      [*, LANES] f32 packed bias buffer
    Returns tanh(prediction_mean) of shape [B, 1] (f32).
    """
    f32, bf16 = jnp.float32, jnp.bfloat16
    B, L4, T = lob_slab.shape
    H = HIDDEN
    brows, _ = _bias_rows(num_layers)

    def brow(name, n):
        r = brows[name]
        return bias[r:r + 1, 0:n]

    b1 = brow('b1', 2 * LEVELS * CONV_A)
    b2 = brow('b2', LEVELS * CONV_B)
    b3 = brow('b3', CONV_C)
    bt = brow('bt', TRANS)
    bgs = [brow(f'bg{l}', 4 * H) for l in range(num_layers)]
    bout = brow('bout', 1)

    def bdot(a, w):
        # bf16 operands (single MXU pass), f32 accumulation.
        return jnp.dot(a.astype(bf16), w, preferred_element_type=f32)

    relu = lambda v: jnp.maximum(v, 0.0)

    # [B, F, T] -> [B*T, F]: aligned minor-dims transpose + tile-aligned merge.
    lob = jnp.transpose(lob_slab, (0, 2, 1)).reshape(B * T, L4)       # [BT, 4L]
    tail = jnp.transpose(tail_slab, (0, 2, 1)).reshape(B * T, _TAIL)  # [BT, 8]

    # Conv frontend (pre-folded block-diagonal weights) + translation layer,
    # batched over all B*T rows.
    out1 = relu(bdot(lob, wget('w1')) + b1)                           # [BT, 2L*Ca]
    out2 = relu(bdot(out1, wget('w2')) + b2)                          # [BT, L*Cb]
    out3 = relu(bdot(out2, wget('w3')) + b3)                          # [BT, Cc]
    trans = relu(bdot(out3, wget('wtc')) + bdot(tail, wget('wta')) + bt)  # [BT, TRANS]

    # Layer-0 input-to-hidden gates for ALL timesteps in one matmul
    # (fused bih+bhh bias folded in).
    gates0 = (bdot(trans, wget('wih0')) + bgs[0]).reshape(B, T, 4 * H)

    whhs = [wget(f'whh{l}') for l in range(num_layers)]
    wihs = [wget(f'wih{l}') for l in range(1, num_layers)]

    # sigmoid(x) = 0.5*(1 + tanh(0.5*x)): one tanh EUP pass over the whole
    # [B, 4H] gate vector covers i/f/o (sigmoid) and g (tanh).
    col = jax.lax.broadcasted_iota(jnp.int32, (B, 4 * H), 1)
    is_g = (col >= 2 * H) & (col < 3 * H)
    g_scale = jnp.where(is_g, 1.0, 0.5).astype(f32)
    g_shift = jnp.where(is_g, 0.0, 0.5).astype(f32)

    def lstm_cell(gates, c_prev):
        act = jnp.tanh(gates * g_scale) * g_scale + g_shift
        i = act[:, 0 * H:1 * H]
        f = act[:, 1 * H:2 * H]
        g = act[:, 2 * H:3 * H]
        o = act[:, 3 * H:4 * H]
        c_new = f * c_prev + i * g
        h_new = o * jnp.tanh(c_new)
        return h_new, c_new

    hs = [jnp.zeros((B, H), f32) for _ in range(num_layers)]
    cs = [jnp.zeros((B, H), f32) for _ in range(num_layers)]

    # TODO(synk): nn.LSTM inter-layer dropout (training mode) is not modeled
    # (inference semantics).
    for t in range(T):                              # static T -> fully unrolled
        hh = ([None] * num_layers if t == 0 else
              [bdot(hs[l], whhs[l]) for l in range(num_layers)])
        g0 = gates0[:, t, :]
        if hh[0] is not None:
            g0 = g0 + hh[0]
        hs[0], cs[0] = lstm_cell(g0, cs[0])
        for l in range(1, num_layers):
            gl = bdot(hs[l - 1], wihs[l - 1]) + bgs[l]
            if hh[l] is not None:
                gl = gl + hh[l]
            hs[l], cs[l] = lstm_cell(gl, cs[l])

    pred = bdot(hs[-1], wget('wout')) + bout        # [B, 1]
    return jnp.tanh(pred)


# ------------------------------ fused kernel ---------------------------------
def _make_fused_kernel(num_layers, state_size):
    wl, _ = _weight_layout(num_layers)

    def kernel(x_ref, w_ref, b_ref, out_ref):
        def wget(name):
            r0, nr, nc = wl[name]
            return w_ref[r0:r0 + nr, 0:nc]          # static slice of the packed buffer

        lob_slab = x_ref[:, 0:4 * LEVELS, :]                         # [B, 4L, T]
        tail_slab = x_ref[:, state_size - _TAIL:state_size, :]       # [B, 8, T]
        out_ref[...] = _forward_math(lob_slab, tail_slab, wget, b_ref[...], num_layers)
    return kernel


# --------------------------------- wrapper ------------------------------------
@jax.jit
def lob_rnn_discrete_forward(x, wbuf, bbuf, log_std):
    """x: [B, statesize, T] float32.  Returns (mean [B], std [1])."""
    B, S, T = x.shape
    out = pl.pallas_call(
        _make_fused_kernel(NUM_LAYERS, S),
        out_shape=jax.ShapeDtypeStruct((B, 1), jnp.float32),
        in_specs=[pl.BlockSpec(memory_space=pltpu.MemorySpace.VMEM)] * 3,
        out_specs=pl.BlockSpec(memory_space=pltpu.MemorySpace.VMEM),
    )(x, wbuf, bbuf)
    final_mean = out[:, 0]                          # tanh(...).squeeze(1)
    final_std = jnp.exp(log_std)                    # exp(log_std), shape [1]
    return final_mean, final_std


# ------------------------------- parameters ----------------------------------
def init_params(key):
    ks = jax.random.split(key, 16)
    s = 0.2
    p = {}
    p['W1'] = jax.random.normal(ks[0], (CONV_A, 1, 1, 2), jnp.float32) * s
    p['b1'] = jax.random.normal(ks[1], (CONV_A,), jnp.float32) * s
    p['W2'] = jax.random.normal(ks[2], (CONV_B, CONV_A, 1, 2), jnp.float32) * s
    p['b2'] = jax.random.normal(ks[3], (CONV_B,), jnp.float32) * s
    p['W3'] = jax.random.normal(ks[4], (CONV_C, CONV_B, 1, LEVELS), jnp.float32) * s
    p['b3'] = jax.random.normal(ks[5], (CONV_C,), jnp.float32) * s
    p['Wt'] = jax.random.normal(ks[6], (TRANS, CONV_C + AUX), jnp.float32) * s
    p['bt'] = jax.random.normal(ks[7], (TRANS,), jnp.float32) * s
    lstm = []
    for l in range(NUM_LAYERS):
        in_f = TRANS if l == 0 else HIDDEN
        k = jax.random.split(ks[8 + l], 4)
        lstm.append((
            jax.random.normal(k[0], (4 * HIDDEN, in_f), jnp.float32) * s,   # weight_ih
            jax.random.normal(k[1], (4 * HIDDEN, HIDDEN), jnp.float32) * s, # weight_hh
            jax.random.normal(k[2], (4 * HIDDEN,), jnp.float32) * s,        # bias_ih
            jax.random.normal(k[3], (4 * HIDDEN,), jnp.float32) * s,        # bias_hh
        ))
    p['lstm'] = lstm
    p['Wout'] = jax.random.normal(ks[12], (1, HIDDEN), jnp.float32) * s
    p['bout'] = jax.random.normal(ks[13], (1,), jnp.float32) * s
    p['log_std'] = jnp.zeros((1,), jnp.float32)
    return p


def _block_diag(blocks):
    r, c = blocks[0].shape
    n = len(blocks)
    out = jnp.zeros((n * r, n * c), blocks[0].dtype)
    for i, b in enumerate(blocks):
        out = out.at[i * r:(i + 1) * r, i * c:(i + 1) * c].set(b)
    return out


def prepare_params(p):
    """One-time packing of PyTorch-layout weights into two lane-dense buffers:
    a single bf16 weight buffer and a single f32 bias buffer (2 input DMAs total)."""
    L = LEVELS
    wl, wrows = _weight_layout(NUM_LAYERS)
    brows, nbrows = _bias_rows(NUM_LAYERS)

    mats = {}
    w1m = jnp.transpose(p['W1'][:, 0, 0, :])                               # [2, Ca]
    mats['w1'] = _block_diag([w1m] * (2 * L))                              # [4L, 2L*Ca]
    w2k0 = jnp.transpose(p['W2'][:, :, 0, 0])                              # [Ca, Cb]
    w2k1 = jnp.transpose(p['W2'][:, :, 0, 1])                              # [Ca, Cb]
    mats['w2'] = _block_diag([jnp.concatenate([w2k0, w2k1], axis=0)] * L)  # [2L*Ca, L*Cb]
    mats['w3'] = jnp.transpose(p['W3'][:, :, 0, :], (2, 1, 0)).reshape(L * CONV_B, CONV_C)
    wt_t = jnp.transpose(p['Wt'])                                          # [Cc+A, TRANS]
    mats['wtc'] = wt_t[:CONV_C, :]
    # Aux weights occupy the LAST AUX rows of an 8-row block so the kernel can
    # read an 8-aligned "tail" slab of the state (non-aux rows hit zero weights).
    wta = jnp.zeros((_TAIL, TRANS), jnp.float32)
    mats['wta'] = wta.at[_TAIL - AUX:, :].set(wt_t[CONV_C:, :])
    for l, (wih, whh, bih, bhh) in enumerate(p['lstm']):
        mats[f'wih{l}'] = jnp.transpose(wih)                               # [in, 4H]
        mats[f'whh{l}'] = jnp.transpose(whh)                               # [H, 4H]
    mats['wout'] = jnp.transpose(p['Wout'])                                # [H, 1]

    wbuf = jnp.zeros((wrows, LANES), jnp.float32)
    for name, (r0, nr, nc) in wl.items():
        m = mats[name]
        assert m.shape == (nr, nc), (name, m.shape, (nr, nc))
        wbuf = wbuf.at[r0:r0 + nr, :nc].set(m)
    wbuf = wbuf.astype(jnp.bfloat16)       # matmul operands in bf16 (f32 accumulation)

    bbuf = jnp.zeros((nbrows, LANES), jnp.float32)
    bbuf = bbuf.at[brows['b1'], :2 * L * CONV_A].set(jnp.tile(p['b1'], 2 * L))
    bbuf = bbuf.at[brows['b2'], :L * CONV_B].set(jnp.tile(p['b2'], L))
    bbuf = bbuf.at[brows['b3'], :CONV_C].set(p['b3'])
    bbuf = bbuf.at[brows['bt'], :TRANS].set(p['bt'])
    for l, (wih, whh, bih, bhh) in enumerate(p['lstm']):
        bbuf = bbuf.at[brows[f'bg{l}'], :4 * HIDDEN].set(bih + bhh)        # fused bias
    bbuf = bbuf.at[brows['bout'], :1].set(p['bout'])
    return jax.device_put(wbuf), jax.device_put(bbuf)


# -------------------- numerics-matched pure-JAX reference ---------------------
def matched_reference(x, wbuf, bbuf, log_std):
    """Exactly the kernel's math (same packed buffers, same bf16 dot sites, same
    sigmoid-via-tanh) evaluated with plain XLA ops -- tight check of the Pallas
    lowering itself."""
    wl, _ = _weight_layout(NUM_LAYERS)
    B, S, T = x.shape

    def wget(name):
        r0, nr, nc = wl[name]
        return wbuf[r0:r0 + nr, 0:nc]

    lob_slab = x[:, 0:4 * LEVELS, :]
    tail_slab = x[:, S - _TAIL:S, :]
    mean = _forward_math(lob_slab, tail_slab, wget, bbuf, NUM_LAYERS)[:, 0]
    return mean, jnp.exp(log_std)


# ------------------------ exact f32 reference (check) --------------------------
def reference_forward(x, p):
    B, S, T = x.shape
    L, A = LEVELS, AUX
    lob = x[:, :4 * L, :]
    aux = x[:, S - A:, :]
    h = jnp.transpose(lob, (0, 2, 1))                                  # [B,T,4L]
    x1p = h.reshape(B, T, 2 * L, 2)
    out1 = jnp.einsum('btwk,ok->botw', x1p, p['W1'][:, 0, 0, :]) + p['b1'][None, :, None, None]
    out1 = jnp.maximum(out1, 0.0)                                      # [B,Ca,T,2L]
    x2p = out1.reshape(B, CONV_A, T, L, 2)
    out2 = jnp.einsum('bitwk,oik->botw', x2p, p['W2'][:, :, 0, :]) + p['b2'][None, :, None, None]
    out2 = jnp.maximum(out2, 0.0)                                      # [B,Cb,T,L]
    out3 = jnp.einsum('bitk,oik->bot', out2, p['W3'][:, :, 0, :]) + p['b3'][None, :, None]
    out3 = jnp.maximum(out3, 0.0)                                      # [B,Cc,T]
    concat = jnp.concatenate([out3, aux], axis=1)                      # [B,Cc+A,T]
    trans = jnp.einsum('bft,of->bot', concat, p['Wt']) + p['bt'][None, :, None]
    trans = jnp.maximum(trans, 0.0)                                    # [B,TRANS,T]
    seq = jnp.transpose(trans, (0, 2, 1))                              # [B,T,TRANS]
    hs = [jnp.zeros((B, HIDDEN), jnp.float32) for _ in range(NUM_LAYERS)]
    cs = [jnp.zeros((B, HIDDEN), jnp.float32) for _ in range(NUM_LAYERS)]
    last = None
    for t in range(T):
        x_in = seq[:, t, :]
        for l in range(NUM_LAYERS):
            Wih, Whh, bih, bhh = p['lstm'][l]
            gates = x_in @ Wih.T + bih + hs[l] @ Whh.T + bhh
            i, f, g, o = jnp.split(gates, 4, axis=1)
            i = jax.nn.sigmoid(i)
            f = jax.nn.sigmoid(f)
            g = jnp.tanh(g)
            o = jax.nn.sigmoid(o)
            cs[l] = f * cs[l] + i * g
            hs[l] = o * jnp.tanh(cs[l])
            x_in = hs[l]
        last = x_in
    pred = last @ p['Wout'].T + p['bout']
    mean = jnp.tanh(pred)[:, 0]
    std = jnp.exp(p['log_std'])
    return mean, std


if __name__ == "__main__":
    key = jax.random.PRNGKey(0)
    pkey, xkey = jax.random.split(key)
    params = init_params(pkey)
    wbuf, bbuf = prepare_params(params)        # one-time parameter packing
    x = jax.random.normal(xkey, (BATCH, STATE, TIME), jnp.float32)

    mean, std = lob_rnn_discrete_forward(x, wbuf, bbuf, params['log_std'])
    mean = jax.block_until_ready(mean)
    std = jax.block_until_ready(std)
    assert mean.shape == (BATCH,) and std.shape == (1,)

    # Tight check: Pallas kernel vs the numerics-matched pure-JAX reference
    # (identical packing, identical bf16 dot sites, identical sigmoid-via-tanh).
    # Any lowering / BlockSpec / buffer-slicing bug shows up here at O(1e-2)+.
    mean_m, std_m = matched_reference(x, wbuf, bbuf, params['log_std'])
    assert jnp.allclose(mean, mean_m, atol=5e-4, rtol=5e-4), (mean, mean_m)
    assert jnp.allclose(std, std_m)

    # Structural check vs the exact f32 PyTorch-semantics reference.  The kernel
    # uses bf16 matmul operands (f32 accumulation), so allow an absolute budget
    # of a few 1e-2 on the tanh-bounded output; packing bugs produce O(0.1-1)
    # errors and are still caught.
    mean_ref, std_ref = reference_forward(x, params)
    assert jnp.allclose(mean, mean_ref, atol=4e-2, rtol=0.0), (mean, mean_ref)
    assert jnp.allclose(std, std_ref)
    print("KERNEL_OK")
</pallas_src>

<mosaic_0001>
module attributes {stable_mosaic.version = 11 : i64} {
  func.func @kernel(%arg0: memref<2x19x8xf32, #tpu.memory_space<vmem>>, %arg1: memref<272x128xbf16, #tpu.memory_space<vmem>>, %arg2: memref<8x128xf32, #tpu.memory_space<vmem>>, %arg3: memref<2x1xf32, #tpu.memory_space<vmem>>) attributes {dimension_semantics = [], scalar_prefetch = 0 : i64, scratch_operands = 0 : i64, tpu.core_type = #tpu.core_type<tc>} {
    %c0 = arith.constant 0 : index
    %c0_0 = arith.constant 0 : index
    %c0_1 = arith.constant 0 : index
    %0 = vector.load %arg0[%c0, %c0_0, %c0_1] : memref<2x19x8xf32, #tpu.memory_space<vmem>>, vector<2x16x8xf32>
    %c0_2 = arith.constant 0 : index
    %c11 = arith.constant 11 : index
    %c0_3 = arith.constant 0 : index
    %1 = vector.load %arg0[%c0_2, %c11, %c0_3] : memref<2x19x8xf32, #tpu.memory_space<vmem>>, vector<2x8x8xf32>
    %c0_4 = arith.constant 0 : index
    %c0_5 = arith.constant 0 : index
    %2 = vector.load %arg2[%c0_4, %c0_5] : memref<8x128xf32, #tpu.memory_space<vmem>>, vector<8x128xf32>
    %3 = vector.extract_strided_slice %2 {offsets = [0, 0], sizes = [1, 64], strides = [1, 1]} : vector<8x128xf32> to vector<1x64xf32>
    %4 = vector.extract_strided_slice %2 {offsets = [1, 0], sizes = [1, 32], strides = [1, 1]} : vector<8x128xf32> to vector<1x32xf32>
    %5 = vector.extract_strided_slice %2 {offsets = [2, 0], sizes = [1, 8], strides = [1, 1]} : vector<8x128xf32> to vector<1x8xf32>
    %6 = vector.extract_strided_slice %2 {offsets = [3, 0], sizes = [1, 16], strides = [1, 1]} : vector<8x128xf32> to vector<1x16xf32>
    %7 = vector.extract_strided_slice %2 {offsets = [4, 0], sizes = [1, 128], strides = [1, 1]} : vector<8x128xf32> to vector<1x128xf32>
    %8 = vector.extract_strided_slice %2 {offsets = [5, 0], sizes = [1, 128], strides = [1, 1]} : vector<8x128xf32> to vector<1x128xf32>
    %9 = vector.extract_strided_slice %2 {offsets = [6, 0], sizes = [1, 1], strides = [1, 1]} : vector<8x128xf32> to vector<1x1xf32>
    %10 = tpu.transpose %0, [0, 2, 1] : vector<2x16x8xf32> -> vector<2x8x16xf32>
    %11 = vector.shape_cast %10 : vector<2x8x16xf32> to vector<16x16xf32>
    %12 = tpu.transpose %1, [0, 2, 1] : vector<2x8x8xf32> -> vector<2x8x8xf32>
    %13 = vector.shape_cast %12 : vector<2x8x8xf32> to vector<16x8xf32>
    %c0_6 = arith.constant 0 : index
    %c0_7 = arith.constant 0 : index
    %14 = vector.load %arg1[%c0_6, %c0_7] : memref<272x128xbf16, #tpu.memory_space<vmem>>, vector<16x64xbf16>
    %15 = arith.truncf %11 : vector<16x16xf32> to vector<16x16xbf16>
    %cst = arith.constant dense<0.000000e+00> : vector<16x64xf32>
    %16 = tpu.matmul %15, %14, %cst {dimension_numbers = #tpu.dot_dimension_numbers<[1], [0], [0], [1], [0, 0, 1, 1], [], []>} : vector<16x16xbf16>, vector<16x64xbf16>, vector<16x64xf32> -> vector<16x64xf32>
    %17 = vector.broadcast %3 : vector<1x64xf32> to vector<16x64xf32>
    %18 = arith.addf %16, %17 : vector<16x64xf32>
    %cst_8 = arith.constant 0.000000e+00 : f32
    %19 = vector.broadcast %cst_8 : f32 to vector<16x64xf32>
    %20 = arith.maximumf %18, %19 : vector<16x64xf32>
    %c16 = arith.constant 16 : index
    %c0_9 = arith.constant 0 : index
    %21 = vector.load %arg1[%c16, %c0_9] : memref<272x128xbf16, #tpu.memory_space<vmem>>, vector<64x32xbf16>
    %22 = arith.truncf %20 : vector<16x64xf32> to vector<16x64xbf16>
    %cst_10 = arith.constant dense<0.000000e+00> : vector<16x32xf32>
    %23 = tpu.matmul %22, %21, %cst_10 {dimension_numbers = #tpu.dot_dimension_numbers<[1], [0], [0], [1], [0, 0, 1, 1], [], []>} : vector<16x64xbf16>, vector<64x32xbf16>, vector<16x32xf32> -> vector<16x32xf32>
    %24 = vector.broadcast %4 : vector<1x32xf32> to vector<16x32xf32>
    %25 = arith.addf %23, %24 : vector<16x32xf32>
    %cst_11 = arith.constant 0.000000e+00 : f32
    %26 = vector.broadcast %cst_11 : f32 to vector<16x32xf32>
    %27 = arith.maximumf %25, %26 : vector<16x32xf32>
    %c80 = arith.constant 80 : index
    %c0_12 = arith.constant 0 : index
    %28 = vector.load %arg1[%c80, %c0_12] : memref<272x128xbf16, #tpu.memory_space<vmem>>, vector<32x8xbf16>
    %29 = arith.truncf %27 : vector<16x32xf32> to vector<16x32xbf16>
    %cst_13 = arith.constant dense<0.000000e+00> : vector<16x8xf32>
    %30 = tpu.matmul %29, %28, %cst_13 {dimension_numbers = #tpu.dot_dimension_numbers<[1], [0], [0], [1], [0, 0, 1, 1], [], []>} : vector<16x32xbf16>, vector<32x8xbf16>, vector<16x8xf32> -> vector<16x8xf32>
    %31 = vector.broadcast %5 : vector<1x8xf32> to vector<16x8xf32>
    %32 = arith.addf %30, %31 : vector<16x8xf32>
    %cst_14 = arith.constant 0.000000e+00 : f32
    %33 = vector.broadcast %cst_14 : f32 to vector<16x8xf32>
    %34 = arith.maximumf %32, %33 : vector<16x8xf32>
    %c112 = arith.constant 112 : index
    %c0_15 = arith.constant 0 : index
    %35 = vector.load %arg1[%c112, %c0_15] : memref<272x128xbf16, #tpu.memory_space<vmem>>, vector<8x16xbf16>
    %36 = arith.truncf %34 : vector<16x8xf32> to vector<16x8xbf16>
    %cst_16 = arith.constant dense<0.000000e+00> : vector<16x16xf32>
    %37 = tpu.matmul %36, %35, %cst_16 {dimension_numbers = #tpu.dot_dimension_numbers<[1], [0], [0], [1], [0, 0, 1, 1], [], []>} : vector<16x8xbf16>, vector<8x16xbf16>, vector<16x16xf32> -> vector<16x16xf32>
    %c120 = arith.constant 120 : index
    %c0_17 = arith.constant 0 : index
    %38 = vector.load %arg1[%c120, %c0_17] : memref<272x128xbf16, #tpu.memory_space<vmem>>, vector<8x16xbf16>
    %39 = arith.truncf %13 : vector<16x8xf32> to vector<16x8xbf16>
    %cst_18 = arith.constant dense<0.000000e+00> : vector<16x16xf32>
    %40 = tpu.matmul %39, %38, %cst_18 {dimension_numbers = #tpu.dot_dimension_numbers<[1], [0], [0], [1], [0, 0, 1, 1], [], []>} : vector<16x8xbf16>, vector<8x16xbf16>, vector<16x16xf32> -> vector<16x16xf32>
    %41 = arith.addf %37, %40 : vector<16x16xf32>
    %42 = vector.broadcast %6 : vector<1x16xf32> to vector<16x16xf32>
    %43 = arith.addf %41, %42 : vector<16x16xf32>
    %cst_19 = arith.constant 0.000000e+00 : f32
    %44 = vector.broadcast %cst_19 : f32 to vector<16x16xf32>
    %45 = arith.maximumf %43, %44 : vector<16x16xf32>
    %c128 = arith.constant 128 : index
    %c0_20 = arith.constant 0 : index
    %46 = vector.load %arg1[%c128, %c0_20] : memref<272x128xbf16, #tpu.memory_space<vmem>>, vector<16x128xbf16>
    %47 = arith.truncf %45 : vector<16x16xf32> to vector<16x16xbf16>
    %cst_21 = arith.constant dense<0.000000e+00> : vector<16x128xf32>
    %48 = tpu.matmul %47, %46, %cst_21 {dimension_numbers = #tpu.dot_dimension_numbers<[1], [0], [0], [1], [0, 0, 1, 1], [], []>} : vector<16x16xbf16>, vector<16x128xbf16>, vector<16x128xf32> -> vector<16x128xf32>
    %49 = vector.broadcast %7 : vector<1x128xf32> to vector<16x128xf32>
    %50 = arith.addf %48, %49 : vector<16x128xf32>
    %51 = vector.shape_cast %50 : vector<16x128xf32> to vector<2x8x128xf32>
    %c144 = arith.constant 144 : index
    %c0_22 = arith.constant 0 : index
    %52 = vector.load %arg1[%c144, %c0_22] : memref<272x128xbf16, #tpu.memory_space<vmem>>, vector<32x128xbf16>
    %c208 = arith.constant 208 : index
    %c0_23 = arith.constant 0 : index
    %53 = vector.load %arg1[%c208, %c0_23] : memref<272x128xbf16, #tpu.memory_space<vmem>>, vector<32x128xbf16>
    %c176 = arith.constant 176 : index
    %c0_24 = arith.constant 0 : index
    %54 = vector.load %arg1[%c176, %c0_24] : memref<272x128xbf16, #tpu.memory_space<vmem>>, vector<32x128xbf16>
    %55 = tpu.iota {dimensions = array<i32: 1>} : vector<2x128xi32>
    %c64_i32 = arith.constant 64 : i32
    %56 = vector.broadcast %c64_i32 : i32 to vector<2x128xi32>
    %57 = arith.cmpi sge, %55, %56 : vector<2x128xi32>
    %c96_i32 = arith.constant 96 : i32
    %58 = vector.broadcast %c96_i32 : i32 to vector<2x128xi32>
    %59 = arith.cmpi slt, %55, %58 : vector<2x128xi32>
    %60 = arith.andi %57, %59 : vector<2x128xi1>
    %cst_25 = arith.constant 1.000000e+00 : f32
    %cst_26 = arith.constant 5.000000e-01 : f32
    %61 = vector.broadcast %cst_25 : f32 to vector<2x128xf32>
    %62 = vector.broadcast %cst_26 : f32 to vector<2x128xf32>
    %63 = arith.select %60, %61, %62 : vector<2x128xi1>, vector<2x128xf32>
    %cst_27 = arith.constant 0.000000e+00 : f32
    %cst_28 = arith.constant 5.000000e-01 : f32
    %64 = vector.broadcast %cst_27 : f32 to vector<2x128xf32>
    %65 = vector.broadcast %cst_28 : f32 to vector<2x128xf32>
    %66 = arith.select %60, %64, %65 : vector<2x128xi1>, vector<2x128xf32>
    %cst_29 = arith.constant 0.000000e+00 : f32
    %67 = vector.broadcast %cst_29 : f32 to vector<2x32xf32>
    %cst_30 = arith.constant 0.000000e+00 : f32
    %68 = vector.broadcast %cst_30 : f32 to vector<2x32xf32>
    %69 = vector.extract_strided_slice %51 {offsets = [0, 0, 0], sizes = [2, 1, 128], strides = [1, 1, 1]} : vector<2x8x128xf32> to vector<2x1x128xf32>
    %70 = vector.shape_cast %69 : vector<2x1x128xf32> to vector<2x128xf32>
    %71 = arith.mulf %70, %63 : vector<2x128xf32>
    %72 = math.tanh %71 : vector<2x128xf32>
    %73 = arith.mulf %72, %63 : vector<2x128xf32>
    %74 = arith.addf %73, %66 : vector<2x128xf32>
    %75 = vector.extract_strided_slice %74 {offsets = [0, 0], sizes = [2, 32], strides = [1, 1]} : vector<2x128xf32> to vector<2x32xf32>
    %76 = vector.extract_strided_slice %74 {offsets = [0, 32], sizes = [2, 32], strides = [1, 1]} : vector<2x128xf32> to vector<2x32xf32>
    %77 = vector.extract_strided_slice %74 {offsets = [0, 64], sizes = [2, 32], strides = [1, 1]} : vector<2x128xf32> to vector<2x32xf32>
    %78 = vector.extract_strided_slice %74 {offsets = [0, 96], sizes = [2, 32], strides = [1, 1]} : vector<2x128xf32> to vector<2x32xf32>
    %79 = arith.mulf %76, %67 : vector<2x32xf32>
    %80 = arith.mulf %75, %77 : vector<2x32xf32>
    %81 = arith.addf %79, %80 : vector<2x32xf32>
    %82 = math.tanh %81 : vector<2x32xf32>
    %83 = arith.mulf %78, %82 : vector<2x32xf32>
    %84 = arith.truncf %83 : vector<2x32xf32> to vector<2x32xbf16>
    %cst_31 = arith.constant dense<0.000000e+00> : vector<2x128xf32>
    %85 = tpu.matmul %84, %54, %cst_31 {dimension_numbers = #tpu.dot_dimension_numbers<[1], [0], [0], [1], [0, 0, 1, 1], [], []>} : vector<2x32xbf16>, vector<32x128xbf16>, vector<2x128xf32> -> vector<2x128xf32>
    %86 = vector.broadcast %8 : vector<1x128xf32> to vector<2x128xf32>
    %87 = arith.addf %85, %86 : vector<2x128xf32>
    %88 = arith.mulf %87, %63 : vector<2x128xf32>
    %89 = math.tanh %88 : vector<2x128xf32>
    %90 = arith.mulf %89, %63 : vector<2x128xf32>
    %91 = arith.addf %90, %66 : vector<2x128xf32>
    %92 = vector.extract_strided_slice %91 {offsets = [0, 0], sizes = [2, 32], strides = [1, 1]} : vector<2x128xf32> to vector<2x32xf32>
    %93 = vector.extract_strided_slice %91 {offsets = [0, 32], sizes = [2, 32], strides = [1, 1]} : vector<2x128xf32> to vector<2x32xf32>
    %94 = vector.extract_strided_slice %91 {offsets = [0, 64], sizes = [2, 32], strides = [1, 1]} : vector<2x128xf32> to vector<2x32xf32>
    %95 = vector.extract_strided_slice %91 {offsets = [0, 96], sizes = [2, 32], strides = [1, 1]} : vector<2x128xf32> to vector<2x32xf32>
    %96 = arith.mulf %93, %68 : vector<2x32xf32>
    %97 = arith.mulf %92, %94 : vector<2x32xf32>
    %98 = arith.addf %96, %97 : vector<2x32xf32>
    %99 = math.tanh %98 : vector<2x32xf32>
    %100 = arith.mulf %95, %99 : vector<2x32xf32>
    %101 = arith.truncf %83 : vector<2x32xf32> to vector<2x32xbf16>
    %cst_32 = arith.constant dense<0.000000e+00> : vector<2x128xf32>
    %102 = tpu.matmul %101, %52, %cst_32 {dimension_numbers = #tpu.dot_dimension_numbers<[1], [0], [0], [1], [0, 0, 1, 1], [], []>} : vector<2x32xbf16>, vector<32x128xbf16>, vector<2x128xf32> -> vector<2x128xf32>
    %103 = arith.truncf %100 : vector<2x32xf32> to vector<2x32xbf16>
    %cst_33 = arith.constant dense<0.000000e+00> : vector<2x128xf32>
    %104 = tpu.matmul %103, %53, %cst_33 {dimension_numbers = #tpu.dot_dimension_numbers<[1], [0], [0], [1], [0, 0, 1, 1], [], []>} : vector<2x32xbf16>, vector<32x128xbf16>, vector<2x128xf32> -> vector<2x128xf32>
    %105 = vector.extract_strided_slice %51 {offsets = [0, 1, 0], sizes = [2, 1, 128], strides = [1, 1, 1]} : vector<2x8x128xf32> to vector<2x1x128xf32>
    %106 = vector.shape_cast %105 : vector<2x1x128xf32> to vector<2x128xf32>
    %107 = arith.addf %106, %102 : vector<2x128xf32>
    %108 = arith.mulf %107, %63 : vector<2x128xf32>
    %109 = math.tanh %108 : vector<2x128xf32>
    %110 = arith.mulf %109, %63 : vector<2x128xf32>
    %111 = arith.addf %110, %66 : vector<2x128xf32>
    %112 = vector.extract_strided_slice %111 {offsets = [0, 0], sizes = [2, 32], strides = [1, 1]} : vector<2x128xf32> to vector<2x32xf32>
    %113 = vector.extract_strided_slice %111 {offsets = [0, 32], sizes = [2, 32], strides = [1, 1]} : vector<2x128xf32> to vector<2x32xf32>
    %114 = vector.extract_strided_slice %111 {offsets = [0, 64], sizes = [2, 32], strides = [1, 1]} : vector<2x128xf32> to vector<2x32xf32>
    %115 = vector.extract_strided_slice %111 {offsets = [0, 96], sizes = [2, 32], strides = [1, 1]} : vector<2x128xf32> to vector<2x32xf32>
    %116 = arith.mulf %113, %81 : vector<2x32xf32>
    %117 = arith.mulf %112, %114 : vector<2x32xf32>
    %118 = arith.addf %116, %117 : vector<2x32xf32>
    %119 = math.tanh %118 : vector<2x32xf32>
    %120 = arith.mulf %115, %119 : vector<2x32xf32>
    %121 = arith.truncf %120 : vector<2x32xf32> to vector<2x32xbf16>
    %cst_34 = arith.constant dense<0.000000e+00> : vector<2x128xf32>
    %122 = tpu.matmul %121, %54, %cst_34 {dimension_numbers = #tpu.dot_dimension_numbers<[1], [0], [0], [1], [0, 0, 1, 1], [], []>} : vector<2x32xbf16>, vector<32x128xbf16>, vector<2x128xf32> -> vector<2x128xf32>
    %123 = vector.broadcast %8 : vector<1x128xf32> to vector<2x128xf32>
    %124 = arith.addf %122, %123 : vector<2x128xf32>
    %125 = arith.addf %124, %104 : vector<2x128xf32>
    %126 = arith.mulf %125, %63 : vector<2x128xf32>
    %127 = math.tanh %126 : vector<2x128xf32>
    %128 = arith.mulf %127, %63 : vector<2x128xf32>
    %129 = arith.addf %128, %66 : vector<2x128xf32>
    %130 = vector.extract_strided_slice %129 {offsets = [0, 0], sizes = [2, 32], strides = [1, 1]} : vector<2x128xf32> to vector<2x32xf32>
    %131 = vector.extract_strided_slice %129 {offsets = [0, 32], sizes = [2, 32], strides = [1, 1]} : vector<2x128xf32> to vector<2x32xf32>
    %132 = vector.extract_strided_slice %129 {offsets = [0, 64], sizes = [2, 32], strides = [1, 1]} : vector<2x128xf32> to vector<2x32xf32>
    %133 = vector.extract_strided_slice %129 {offsets = [0, 96], sizes = [2, 32], strides = [1, 1]} : vector<2x128xf32> to vector<2x32xf32>
    %134 = arith.mulf %131, %98 : vector<2x32xf32>
    %135 = arith.mulf %130, %132 : vector<2x32xf32>
    %136 = arith.addf %134, %135 : vector<2x32xf32>
    %137 = math.tanh %136 : vector<2x32xf32>
    %138 = arith.mulf %133, %137 : vector<2x32xf32>
    %139 = arith.truncf %120 : vector<2x32xf32> to vector<2x32xbf16>
    %cst_35 = arith.constant dense<0.000000e+00> : vector<2x128xf32>
    %140 = tpu.matmul %139, %52, %cst_35 {dimension_numbers = #tpu.dot_dimension_numbers<[1], [0], [0], [1], [0, 0, 1, 1], [], []>} : vector<2x32xbf16>, vector<32x128xbf16>, vector<2x128xf32> -> vector<2x128xf32>
    %141 = arith.truncf %138 : vector<2x32xf32> to vector<2x32xbf16>
    %cst_36 = arith.constant dense<0.000000e+00> : vector<2x128xf32>
    %142 = tpu.matmul %141, %53, %cst_36 {dimension_numbers = #tpu.dot_dimension_numbers<[1], [0], [0], [1], [0, 0, 1, 1], [], []>} : vector<2x32xbf16>, vector<32x128xbf16>, vector<2x128xf32> -> vector<2x128xf32>
    %143 = vector.extract_strided_slice %51 {offsets = [0, 2, 0], sizes = [2, 1, 128], strides = [1, 1, 1]} : vector<2x8x128xf32> to vector<2x1x128xf32>
    %144 = vector.shape_cast %143 : vector<2x1x128xf32> to vector<2x128xf32>
    %145 = arith.addf %144, %140 : vector<2x128xf32>
    %146 = arith.mulf %145, %63 : vector<2x128xf32>
    %147 = math.tanh %146 : vector<2x128xf32>
    %148 = arith.mulf %147, %63 : vector<2x128xf32>
    %149 = arith.addf %148, %66 : vector<2x128xf32>
    %150 = vector.extract_strided_slice %149 {offsets = [0, 0], sizes = [2, 32], strides = [1, 1]} : vector<2x128xf32> to vector<2x32xf32>
    %151 = vector.extract_strided_slice %149 {offsets = [0, 32], sizes = [2, 32], strides = [1, 1]} : vector<2x128xf32> to vector<2x32xf32>
    %152 = vector.extract_strided_slice %149 {offsets = [0, 64], sizes = [2, 32], strides = [1, 1]} : vector<2x128xf32> to vector<2x32xf32>
    %153 = vector.extract_strided_slice %149 {offsets = [0, 96], sizes = [2, 32], strides = [1, 1]} : vector<2x128xf32> to vector<2x32xf32>
    %154 = arith.mulf %151, %118 : vector<2x32xf32>
    %155 = arith.mulf %150, %152 : vector<2x32xf32>
    %156 = arith.addf %154, %155 : vector<2x32xf32>
    %157 = math.tanh %156 : vector<2x32xf32>
    %158 = arith.mulf %153, %157 : vector<2x32xf32>
    %159 = arith.truncf %158 : vector<2x32xf32> to vector<2x32xbf16>
    %cst_37 = arith.constant dense<0.000000e+00> : vector<2x128xf32>
    %160 = tpu.matmul %159, %54, %cst_37 {dimension_numbers = #tpu.dot_dimension_numbers<[1], [0], [0], [1], [0, 0, 1, 1], [], []>} : vector<2x32xbf16>, vector<32x128xbf16>, vector<2x128xf32> -> vector<2x128xf32>
    %161 = vector.broadcast %8 : vector<1x128xf32> to vector<2x128xf32>
    %162 = arith.addf %160, %161 : vector<2x128xf32>
    %163 = arith.addf %162, %142 : vector<2x128xf32>
    %164 = arith.mulf %163, %63 : vector<2x128xf32>
    %165 = math.tanh %164 : vector<2x128xf32>
    %166 = arith.mulf %165, %63 : vector<2x128xf32>
    %167 = arith.addf %166, %66 : vector<2x128xf32>
    %168 = vector.extract_strided_slice %167 {offsets = [0, 0], sizes = [2, 32], strides = [1, 1]} : vector<2x128xf32> to vector<2x32xf32>
    %169 = vector.extract_strided_slice %167 {offsets = [0, 32], sizes = [2, 32], strides = [1, 1]} : vector<2x128xf32> to vector<2x32xf32>
    %170 = vector.extract_strided_slice %167 {offsets = [0, 64], sizes = [2, 32], strides = [1, 1]} : vector<2x128xf32> to vector<2x32xf32>
    %171 = vector.extract_strided_slice %167 {offsets = [0, 96], sizes = [2, 32], strides = [1, 1]} : vector<2x128xf32> to vector<2x32xf32>
    %172 = arith.mulf %169, %136 : vector<2x32xf32>
    %173 = arith.mulf %168, %170 : vector<2x32xf32>
    %174 = arith.addf %172, %173 : vector<2x32xf32>
    %175 = math.tanh %174 : vector<2x32xf32>
    %176 = arith.mulf %171, %175 : vector<2x32xf32>
    %177 = arith.truncf %158 : vector<2x32xf32> to vector<2x32xbf16>
    %cst_38 = arith.constant dense<0.000000e+00> : vector<2x128xf32>
    %178 = tpu.matmul %177, %52, %cst_38 {dimension_numbers = #tpu.dot_dimension_numbers<[1], [0], [0], [1], [0, 0, 1, 1], [], []>} : vector<2x32xbf16>, vector<32x128xbf16>, vector<2x128xf32> -> vector<2x128xf32>
    %179 = arith.truncf %176 : vector<2x32xf32> to vector<2x32xbf16>
    %cst_39 = arith.constant dense<0.000000e+00> : vector<2x128xf32>
    %180 = tpu.matmul %179, %53, %cst_39 {dimension_numbers = #tpu.dot_dimension_numbers<[1], [0], [0], [1], [0, 0, 1, 1], [], []>} : vector<2x32xbf16>, vector<32x128xbf16>, vector<2x128xf32> -> vector<2x128xf32>
    %181 = vector.extract_strided_slice %51 {offsets = [0, 3, 0], sizes = [2, 1, 128], strides = [1, 1, 1]} : vector<2x8x128xf32> to vector<2x1x128xf32>
    %182 = vector.shape_cast %181 : vector<2x1x128xf32> to vector<2x128xf32>
    %183 = arith.addf %182, %178 : vector<2x128xf32>
    %184 = arith.mulf %183, %63 : vector<2x128xf32>
    %185 = math.tanh %184 : vector<2x128xf32>
    %186 = arith.mulf %185, %63 : vector<2x128xf32>
    %187 = arith.addf %186, %66 : vector<2x128xf32>
    %188 = vector.extract_strided_slice %187 {offsets = [0, 0], sizes = [2, 32], strides = [1, 1]} : vector<2x128xf32> to vector<2x32xf32>
    %189 = vector.extract_strided_slice %187 {offsets = [0, 32], sizes = [2, 32], strides = [1, 1]} : vector<2x128xf32> to vector<2x32xf32>
    %190 = vector.extract_strided_slice %187 {offsets = [0, 64], sizes = [2, 32], strides = [1, 1]} : vector<2x128xf32> to vector<2x32xf32>
    %191 = vector.extract_strided_slice %187 {offsets = [0, 96], sizes = [2, 32], strides = [1, 1]} : vector<2x128xf32> to vector<2x32xf32>
    %192 = arith.mulf %189, %156 : vector<2x32xf32>
    %193 = arith.mulf %188, %190 : vector<2x32xf32>
    %194 = arith.addf %192, %193 : vector<2x32xf32>
    %195 = math.tanh %194 : vector<2x32xf32>
    %196 = arith.mulf %191, %195 : vector<2x32xf32>
    %197 = arith.truncf %196 : vector<2x32xf32> to vector<2x32xbf16>
    %cst_40 = arith.constant dense<0.000000e+00> : vector<2x128xf32>
    %198 = tpu.matmul %197, %54, %cst_40 {dimension_numbers = #tpu.dot_dimension_numbers<[1], [0], [0], [1], [0, 0, 1, 1], [], []>} : vector<2x32xbf16>, vector<32x128xbf16>, vector<2x128xf32> -> vector<2x128xf32>
    %199 = vector.broadcast %8 : vector<1x128xf32> to vector<2x128xf32>
    %200 = arith.addf %198, %199 : vector<2x128xf32>
    %201 = arith.addf %200, %180 : vector<2x128xf32>
    %202 = arith.mulf %201, %63 : vector<2x128xf32>
    %203 = math.tanh %202 : vector<2x128xf32>
    %204 = arith.mulf %203, %63 : vector<2x128xf32>
    %205 = arith.addf %204, %66 : vector<2x128xf32>
    %206 = vector.extract_strided_slice %205 {offsets = [0, 0], sizes = [2, 32], strides = [1, 1]} : vector<2x128xf32> to vector<2x32xf32>
    %207 = vector.extract_strided_slice %205 {offsets = [0, 32], sizes = [2, 32], strides = [1, 1]} : vector<2x128xf32> to vector<2x32xf32>
    %208 = vector.extract_strided_slice %205 {offsets = [0, 64], sizes = [2, 32], strides = [1, 1]} : vector<2x128xf32> to vector<2x32xf32>
    %209 = vector.extract_strided_slice %205 {offsets = [0, 96], sizes = [2, 32], strides = [1, 1]} : vector<2x128xf32> to vector<2x32xf32>
    %210 = arith.mulf %207, %174 : vector<2x32xf32>
    %211 = arith.mulf %206, %208 : vector<2x32xf32>
    %212 = arith.addf %210, %211 : vector<2x32xf32>
    %213 = math.tanh %212 : vector<2x32xf32>
    %214 = arith.mulf %209, %213 : vector<2x32xf32>
    %215 = arith.truncf %196 : vector<2x32xf32> to vector<2x32xbf16>
    %cst_41 = arith.constant dense<0.000000e+00> : vector<2x128xf32>
    %216 = tpu.matmul %215, %52, %cst_41 {dimension_numbers = #tpu.dot_dimension_numbers<[1], [0], [0], [1], [0, 0, 1, 1], [], []>} : vector<2x32xbf16>, vector<32x128xbf16>, vector<2x128xf32> -> vector<2x128xf32>
    %217 = arith.truncf %214 : vector<2x32xf32> to vector<2x32xbf16>
    %cst_42 = arith.constant dense<0.000000e+00> : vector<2x128xf32>
    %218 = tpu.matmul %217, %53, %cst_42 {dimension_numbers = #tpu.dot_dimension_numbers<[1], [0], [0], [1], [0, 0, 1, 1], [], []>} : vector<2x32xbf16>, vector<32x128xbf16>, vector<2x128xf32> -> vector<2x128xf32>
    %219 = vector.extract_strided_slice %51 {offsets = [0, 4, 0], sizes = [2, 1, 128], strides = [1, 1, 1]} : vector<2x8x128xf32> to vector<2x1x128xf32>
    %220 = vector.shape_cast %219 : vector<2x1x128xf32> to vector<2x128xf32>
    %221 = arith.addf %220, %216 : vector<2x128xf32>
    %222 = arith.mulf %221, %63 : vector<2x128xf32>
    %223 = math.tanh %222 : vector<2x128xf32>
    %224 = arith.mulf %223, %63 : vector<2x128xf32>
    %225 = arith.addf %224, %66 : vector<2x128xf32>
    %226 = vector.extract_strided_slice %225 {offsets = [0, 0], sizes = [2, 32], strides = [1, 1]} : vector<2x128xf32> to vector<2x32xf32>
    %227 = vector.extract_strided_slice %225 {offsets = [0, 32], sizes = [2, 32], strides = [1, 1]} : vector<2x128xf32> to vector<2x32xf32>
    %228 = vector.extract_strided_slice %225 {offsets = [0, 64], sizes = [2, 32], strides = [1, 1]} : vector<2x128xf32> to vector<2x32xf32>
    %229 = vector.extract_strided_slice %225 {offsets = [0, 96], sizes = [2, 32], strides = [1, 1]} : vector<2x128xf32> to vector<2x32xf32>
    %230 = arith.mulf %227, %194 : vector<2x32xf32>
    %231 = arith.mulf %226, %228 : vector<2x32xf32>
    %232 = arith.addf %230, %231 : vector<2x32xf32>
    %233 = math.tanh %232 : vector<2x32xf32>
    %234 = arith.mulf %229, %233 : vector<2x32xf32>
    %235 = arith.truncf %234 : vector<2x32xf32> to vector<2x32xbf16>
    %cst_43 = arith.constant dense<0.000000e+00> : vector<2x128xf32>
    %236 = tpu.matmul %235, %54, %cst_43 {dimension_numbers = #tpu.dot_dimension_numbers<[1], [0], [0], [1], [0, 0, 1, 1], [], []>} : vector<2x32xbf16>, vector<32x128xbf16>, vector<2x128xf32> -> vector<2x128xf32>
    %237 = vector.broadcast %8 : vector<1x128xf32> to vector<2x128xf32>
    %238 = arith.addf %236, %237 : vector<2x128xf32>
    %239 = arith.addf %238, %218 : vector<2x128xf32>
    %240 = arith.mulf %239, %63 : vector<2x128xf32>
    %241 = math.tanh %240 : vector<2x128xf32>
    %242 = arith.mulf %241, %63 : vector<2x128xf32>
    %243 = arith.addf %242, %66 : vector<2x128xf32>
    %244 = vector.extract_strided_slice %243 {offsets = [0, 0], sizes = [2, 32], strides = [1, 1]} : vector<2x128xf32> to vector<2x32xf32>
    %245 = vector.extract_strided_slice %243 {offsets = [0, 32], sizes = [2, 32], strides = [1, 1]} : vector<2x128xf32> to vector<2x32xf32>
    %246 = vector.extract_strided_slice %243 {offsets = [0, 64], sizes = [2, 32], strides = [1, 1]} : vector<2x128xf32> to vector<2x32xf32>
    %247 = vector.extract_strided_slice %243 {offsets = [0, 96], sizes = [2, 32], strides = [1, 1]} : vector<2x128xf32> to vector<2x32xf32>
    %248 = arith.mulf %245, %212 : vector<2x32xf32>
    %249 = arith.mulf %244, %246 : vector<2x32xf32>
    %250 = arith.addf %248, %249 : vector<2x32xf32>
    %251 = math.tanh %250 : vector<2x32xf32>
    %252 = arith.mulf %247, %251 : vector<2x32xf32>
    %253 = arith.truncf %234 : vector<2x32xf32> to vector<2x32xbf16>
    %cst_44 = arith.constant dense<0.000000e+00> : vector<2x128xf32>
    %254 = tpu.matmul %253, %52, %cst_44 {dimension_numbers = #tpu.dot_dimension_numbers<[1], [0], [0], [1], [0, 0, 1, 1], [], []>} : vector<2x32xbf16>, vector<32x128xbf16>, vector<2x128xf32> -> vector<2x128xf32>
    %255 = arith.truncf %252 : vector<2x32xf32> to vector<2x32xbf16>
    %cst_45 = arith.constant dense<0.000000e+00> : vector<2x128xf32>
    %256 = tpu.matmul %255, %53, %cst_45 {dimension_numbers = #tpu.dot_dimension_numbers<[1], [0], [0], [1], [0, 0, 1, 1], [], []>} : vector<2x32xbf16>, vector<32x128xbf16>, vector<2x128xf32> -> vector<2x128xf32>
    %257 = vector.extract_strided_slice %51 {offsets = [0, 5, 0], sizes = [2, 1, 128], strides = [1, 1, 1]} : vector<2x8x128xf32> to vector<2x1x128xf32>
    %258 = vector.shape_cast %257 : vector<2x1x128xf32> to vector<2x128xf32>
    %259 = arith.addf %258, %254 : vector<2x128xf32>
    %260 = arith.mulf %259, %63 : vector<2x128xf32>
    %261 = math.tanh %260 : vector<2x128xf32>
    %262 = arith.mulf %261, %63 : vector<2x128xf32>
    %263 = arith.addf %262, %66 : vector<2x128xf32>
    %264 = vector.extract_strided_slice %263 {offsets = [0, 0], sizes = [2, 32], strides = [1, 1]} : vector<2x128xf32> to vector<2x32xf32>
    %265 = vector.extract_strided_slice %263 {offsets = [0, 32], sizes = [2, 32], strides = [1, 1]} : vector<2x128xf32> to vector<2x32xf32>
    %266 = vector.extract_strided_slice %263 {offsets = [0, 64], sizes = [2, 32], strides = [1, 1]} : vector<2x128xf32> to vector<2x32xf32>
    %267 = vector.extract_strided_slice %263 {offsets = [0, 96], sizes = [2, 32], strides = [1, 1]} : vector<2x128xf32> to vector<2x32xf32>
    %268 = arith.mulf %265, %232 : vector<2x32xf32>
    %269 = arith.mulf %264, %266 : vector<2x32xf32>
    %270 = arith.addf %268, %269 : vector<2x32xf32>
    %271 = math.tanh %270 : vector<2x32xf32>
    %272 = arith.mulf %267, %271 : vector<2x32xf32>
    %273 = arith.truncf %272 : vector<2x32xf32> to vector<2x32xbf16>
    %cst_46 = arith.constant dense<0.000000e+00> : vector<2x128xf32>
    %274 = tpu.matmul %273, %54, %cst_46 {dimension_numbers = #tpu.dot_dimension_numbers<[1], [0], [0], [1], [0, 0, 1, 1], [], []>} : vector<2x32xbf16>, vector<32x128xbf16>, vector<2x128xf32> -> vector<2x128xf32>
    %275 = vector.broadcast %8 : vector<1x128xf32> to vector<2x128xf32>
    %276 = arith.addf %274, %275 : vector<2x128xf32>
    %277 = arith.addf %276, %256 : vector<2x128xf32>
    %278 = arith.mulf %277, %63 : vector<2x128xf32>
    %279 = math.tanh %278 : vector<2x128xf32>
    %280 = arith.mulf %279, %63 : vector<2x128xf32>
    %281 = arith.addf %280, %66 : vector<2x128xf32>
    %282 = vector.extract_strided_slice %281 {offsets = [0, 0], sizes = [2, 32], strides = [1, 1]} : vector<2x128xf32> to vector<2x32xf32>
    %283 = vector.extract_strided_slice %281 {offsets = [0, 32], sizes = [2, 32], strides = [1, 1]} : vector<2x128xf32> to vector<2x32xf32>
    %284 = vector.extract_strided_slice %281 {offsets = [0, 64], sizes = [2, 32], strides = [1, 1]} : vector<2x128xf32> to vector<2x32xf32>
    %285 = vector.extract_strided_slice %281 {offsets = [0, 96], sizes = [2, 32], strides = [1, 1]} : vector<2x128xf32> to vector<2x32xf32>
    %286 = arith.mulf %283, %250 : vector<2x32xf32>
    %287 = arith.mulf %282, %284 : vector<2x32xf32>
    %288 = arith.addf %286, %287 : vector<2x32xf32>
    %289 = math.tanh %288 : vector<2x32xf32>
    %290 = arith.mulf %285, %289 : vector<2x32xf32>
    %291 = arith.truncf %272 : vector<2x32xf32> to vector<2x32xbf16>
    %cst_47 = arith.constant dense<0.000000e+00> : vector<2x128xf32>
    %292 = tpu.matmul %291, %52, %cst_47 {dimension_numbers = #tpu.dot_dimension_numbers<[1], [0], [0], [1], [0, 0, 1, 1], [], []>} : vector<2x32xbf16>, vector<32x128xbf16>, vector<2x128xf32> -> vector<2x128xf32>
    %293 = arith.truncf %290 : vector<2x32xf32> to vector<2x32xbf16>
    %cst_48 = arith.constant dense<0.000000e+00> : vector<2x128xf32>
    %294 = tpu.matmul %293, %53, %cst_48 {dimension_numbers = #tpu.dot_dimension_numbers<[1], [0], [0], [1], [0, 0, 1, 1], [], []>} : vector<2x32xbf16>, vector<32x128xbf16>, vector<2x128xf32> -> vector<2x128xf32>
    %295 = vector.extract_strided_slice %51 {offsets = [0, 6, 0], sizes = [2, 1, 128], strides = [1, 1, 1]} : vector<2x8x128xf32> to vector<2x1x128xf32>
    %296 = vector.shape_cast %295 : vector<2x1x128xf32> to vector<2x128xf32>
    %297 = arith.addf %296, %292 : vector<2x128xf32>
    %298 = arith.mulf %297, %63 : vector<2x128xf32>
    %299 = math.tanh %298 : vector<2x128xf32>
    %300 = arith.mulf %299, %63 : vector<2x128xf32>
    %301 = arith.addf %300, %66 : vector<2x128xf32>
    %302 = vector.extract_strided_slice %301 {offsets = [0, 0], sizes = [2, 32], strides = [1, 1]} : vector<2x128xf32> to vector<2x32xf32>
    %303 = vector.extract_strided_slice %301 {offsets = [0, 32], sizes = [2, 32], strides = [1, 1]} : vector<2x128xf32> to vector<2x32xf32>
    %304 = vector.extract_strided_slice %301 {offsets = [0, 64], sizes = [2, 32], strides = [1, 1]} : vector<2x128xf32> to vector<2x32xf32>
    %305 = vector.extract_strided_slice %301 {offsets = [0, 96], sizes = [2, 32], strides = [1, 1]} : vector<2x128xf32> to vector<2x32xf32>
    %306 = arith.mulf %303, %270 : vector<2x32xf32>
    %307 = arith.mulf %302, %304 : vector<2x32xf32>
    %308 = arith.addf %306, %307 : vector<2x32xf32>
    %309 = math.tanh %308 : vector<2x32xf32>
    %310 = arith.mulf %305, %309 : vector<2x32xf32>
    %311 = arith.truncf %310 : vector<2x32xf32> to vector<2x32xbf16>
    %cst_49 = arith.constant dense<0.000000e+00> : vector<2x128xf32>
    %312 = tpu.matmul %311, %54, %cst_49 {dimension_numbers = #tpu.dot_dimension_numbers<[1], [0], [0], [1], [0, 0, 1, 1], [], []>} : vector<2x32xbf16>, vector<32x128xbf16>, vector<2x128xf32> -> vector<2x128xf32>
    %313 = vector.broadcast %8 : vector<1x128xf32> to vector<2x128xf32>
    %314 = arith.addf %312, %313 : vector<2x128xf32>
    %315 = arith.addf %314, %294 : vector<2x128xf32>
    %316 = arith.mulf %315, %63 : vector<2x128xf32>
    %317 = math.tanh %316 : vector<2x128xf32>
    %318 = arith.mulf %317, %63 : vector<2x128xf32>
    %319 = arith.addf %318, %66 : vector<2x128xf32>
    %320 = vector.extract_strided_slice %319 {offsets = [0, 0], sizes = [2, 32], strides = [1, 1]} : vector<2x128xf32> to vector<2x32xf32>
    %321 = vector.extract_strided_slice %319 {offsets = [0, 32], sizes = [2, 32], strides = [1, 1]} : vector<2x128xf32> to vector<2x32xf32>
    %322 = vector.extract_strided_slice %319 {offsets = [0, 64], sizes = [2, 32], strides = [1, 1]} : vector<2x128xf32> to vector<2x32xf32>
    %323 = vector.extract_strided_slice %319 {offsets = [0, 96], sizes = [2, 32], strides = [1, 1]} : vector<2x128xf32> to vector<2x32xf32>
    %324 = arith.mulf %321, %288 : vector<2x32xf32>
    %325 = arith.mulf %320, %322 : vector<2x32xf32>
    %326 = arith.addf %324, %325 : vector<2x32xf32>
    %327 = math.tanh %326 : vector<2x32xf32>
    %328 = arith.mulf %323, %327 : vector<2x32xf32>
    %329 = arith.truncf %310 : vector<2x32xf32> to vector<2x32xbf16>
    %cst_50 = arith.constant dense<0.000000e+00> : vector<2x128xf32>
    %330 = tpu.matmul %329, %52, %cst_50 {dimension_numbers = #tpu.dot_dimension_numbers<[1], [0], [0], [1], [0, 0, 1, 1], [], []>} : vector<2x32xbf16>, vector<32x128xbf16>, vector<2x128xf32> -> vector<2x128xf32>
    %331 = arith.truncf %328 : vector<2x32xf32> to vector<2x32xbf16>
    %cst_51 = arith.constant dense<0.000000e+00> : vector<2x128xf32>
    %332 = tpu.matmul %331, %53, %cst_51 {dimension_numbers = #tpu.dot_dimension_numbers<[1], [0], [0], [1], [0, 0, 1, 1], [], []>} : vector<2x32xbf16>, vector<32x128xbf16>, vector<2x128xf32> -> vector<2x128xf32>
    %333 = vector.extract_strided_slice %51 {offsets = [0, 7, 0], sizes = [2, 1, 128], strides = [1, 1, 1]} : vector<2x8x128xf32> to vector<2x1x128xf32>
    %334 = vector.shape_cast %333 : vector<2x1x128xf32> to vector<2x128xf32>
    %335 = arith.addf %334, %330 : vector<2x128xf32>
    %336 = arith.mulf %335, %63 : vector<2x128xf32>
    %337 = math.tanh %336 : vector<2x128xf32>
    %338 = arith.mulf %337, %63 : vector<2x128xf32>
    %339 = arith.addf %338, %66 : vector<2x128xf32>
    %340 = vector.extract_strided_slice %339 {offsets = [0, 0], sizes = [2, 32], strides = [1, 1]} : vector<2x128xf32> to vector<2x32xf32>
    %341 = vector.extract_strided_slice %339 {offsets = [0, 32], sizes = [2, 32], strides = [1, 1]} : vector<2x128xf32> to vector<2x32xf32>
    %342 = vector.extract_strided_slice %339 {offsets = [0, 64], sizes = [2, 32], strides = [1, 1]} : vector<2x128xf32> to vector<2x32xf32>
    %343 = vector.extract_strided_slice %339 {offsets = [0, 96], sizes = [2, 32], strides = [1, 1]} : vector<2x128xf32> to vector<2x32xf32>
    %344 = arith.mulf %341, %308 : vector<2x32xf32>
    %345 = arith.mulf %340, %342 : vector<2x32xf32>
    %346 = arith.addf %344, %345 : vector<2x32xf32>
    %347 = math.tanh %346 : vector<2x32xf32>
    %348 = arith.mulf %343, %347 : vector<2x32xf32>
    %349 = arith.truncf %348 : vector<2x32xf32> to vector<2x32xbf16>
    %cst_52 = arith.constant dense<0.000000e+00> : vector<2x128xf32>
    %350 = tpu.matmul %349, %54, %cst_52 {dimension_numbers = #tpu.dot_dimension_numbers<[1], [0], [0], [1], [0, 0, 1, 1], [], []>} : vector<2x32xbf16>, vector<32x128xbf16>, vector<2x128xf32> -> vector<2x128xf32>
    %351 = vector.broadcast %8 : vector<1x128xf32> to vector<2x128xf32>
    %352 = arith.addf %350, %351 : vector<2x128xf32>
    %353 = arith.addf %352, %332 : vector<2x128xf32>
    %354 = arith.mulf %353, %63 : vector<2x128xf32>
    %355 = math.tanh %354 : vector<2x128xf32>
    %356 = arith.mulf %355, %63 : vector<2x128xf32>
    %357 = arith.addf %356, %66 : vector<2x128xf32>
    %358 = vector.extract_strided_slice %357 {offsets = [0, 0], sizes = [2, 32], strides = [1, 1]} : vector<2x128xf32> to vector<2x32xf32>
    %359 = vector.extract_strided_slice %357 {offsets = [0, 32], sizes = [2, 32], strides = [1, 1]} : vector<2x128xf32> to vector<2x32xf32>
    %360 = vector.extract_strided_slice %357 {offsets = [0, 64], sizes = [2, 32], strides = [1, 1]} : vector<2x128xf32> to vector<2x32xf32>
    %361 = vector.extract_strided_slice %357 {offsets = [0, 96], sizes = [2, 32], strides = [1, 1]} : vector<2x128xf32> to vector<2x32xf32>
    %362 = arith.mulf %359, %326 : vector<2x32xf32>
    %363 = arith.mulf %358, %360 : vector<2x32xf32>
    %364 = arith.addf %362, %363 : vector<2x32xf32>
    %365 = math.tanh %364 : vector<2x32xf32>
    %366 = arith.mulf %361, %365 : vector<2x32xf32>
    %c240 = arith.constant 240 : index
    %c0_53 = arith.constant 0 : index
    %367 = vector.load %arg1[%c240, %c0_53] : memref<272x128xbf16, #tpu.memory_space<vmem>>, vector<32x1xbf16>
    %368 = arith.truncf %366 : vector<2x32xf32> to vector<2x32xbf16>
    %cst_54 = arith.constant dense<0.000000e+00> : vector<2x1xf32>
    %369 = tpu.matmul %368, %367, %cst_54 {dimension_numbers = #tpu.dot_dimension_numbers<[1], [0], [0], [1], [0, 0, 1, 1], [], []>} : vector<2x32xbf16>, vector<32x1xbf16>, vector<2x1xf32> -> vector<2x1xf32>
    %370 = vector.broadcast %9 : vector<1x1xf32> to vector<2x1xf32>
    %371 = arith.addf %369, %370 : vector<2x1xf32>
    %372 = math.tanh %371 : vector<2x1xf32>
    %c0_55 = arith.constant 0 : index
    %c0_56 = arith.constant 0 : index
    %373 = vector.load %arg3[%c0_55, %c0_56] : memref<2x1xf32, #tpu.memory_space<vmem>>, vector<2x1xf32>
    tpu.vector_store %arg3[%c0_55, %c0_56], %372 {strides = array<i32>} : memref<2x1xf32, #tpu.memory_space<vmem>>, vector<2x1xf32>,
    return
  }
}

</mosaic_0001>

<llo_original>
// kernel: lob_rnn_discrete_forward.1
$region0: #{lob_rnn_discrete_forward.1}
  #allocation0 [shape = 'u32[]', space=smem, size = 0x4, offset = 0x4, fixed_abs, tag = 'smem constant byte address 0x4 - core index']
  #allocation1 [shape = 'u32[144,128]{1,0:T(1,128)}', space=vmem, size = 0x12000, scoped, tag = 'internal scratch']
  %s0 = inlined_call_operand.vmem [shape: f32[2,19,8], index: 0, kind: input, shape index: {}]
  %s1 = inlined_call_operand.hbm [shape: bf16[272,128], index: 1, kind: input, shape index: {}]
  %s2 = inlined_call_operand.vmem [shape: f32[8,128], index: 2, kind: input, shape index: {}]
  %s3 = inlined_call_operand.vmem [shape: f32[2,1], index: 3, kind: output, shape index: {}]
  %s4 = sld [smem:[#allocation0]]
  $region26: #{lob_rnn_discrete_forward.1} parent=0
    _
  %s6 = ssub.s32 1, %s4
  %s7 = scalar_select 0, %s6, %s4
  $region1: #{lob_rnn_discrete_forward.1} parent=0
    #allocation2 [shape = 'u8[69632]{0}', space=vmem, size = 0x11000, scoped, tag = 'input window, operand 1, single buffered']
    #allocation3 [shape = 's32[1]{0}', space=sflag, size = 0x4, scoped, tag = 'scoped memory for lob_rnn_discrete_forward.1']
    %8 = vsyncpa [#allocation3], 0
    // Predicated region
    $region2: #{lob_rnn_discrete_forward.1} parent=1 // pred_check
      _
    $region3: #{lob_rnn_discrete_forward.1} parent=1 // pred_check_branch
      %10 = sbr.rel (0) target = $region5
    $region4: #{lob_rnn_discrete_forward.1} parent=1 // pred_region
      _
    $region5: #{lob_rnn_discrete_forward.1} parent=1 // pred_fallthru
      _
    // Predicated region
    $region6: #{lob_rnn_discrete_forward.1} parent=1 // pred_check
      _
    $region7: #{lob_rnn_discrete_forward.1} parent=1 // pred_check_branch
      %12 = sbr.rel (0) target = $region9
    $region8: #{lob_rnn_discrete_forward.1} parent=1 // pred_region
      %s14 = ssub.s32 2176, 2176
      %15 = vsyncadd [#allocation3], %s14
      %s16 = sshll.u32 [#allocation2], 4
      %s17 = int_to_ptr.vmem [resolvable:$true] %s16
      %22 = dma.hbm_to_vmem [thread:$0]  %s1, 2176, %s17, [#allocation3], 64, 64, 4
    $region9: #{lob_rnn_discrete_forward.1} parent=1 // pred_fallthru
      _
    // Predicated region
    $region10: #{lob_rnn_discrete_forward.1} parent=1 // pred_check
      _
    $region11: #{lob_rnn_discrete_forward.1} parent=1 // pred_check_branch
      %24 = sbr.rel (0) target = $region13
    $region12: #{lob_rnn_discrete_forward.1} parent=1 // pred_region
      _
    $region13: #{lob_rnn_discrete_forward.1} parent=1 // pred_fallthru
      _
    // Predicated region
    $region14: #{lob_rnn_discrete_forward.1} parent=1 // pred_check
      _
    $region15: #{lob_rnn_discrete_forward.1} parent=1 // pred_check_branch
      %26 = sbr.rel (0) target = $region17
    $region16: #{lob_rnn_discrete_forward.1} parent=1 // pred_region
      %27 = dma.done [#allocation3], 2176
    $region17: #{lob_rnn_discrete_forward.1} parent=1 // pred_fallthru
      _
    %v29 = vld [vmem:[%s0] sm:$0xff]
    %v30 = vld [vmem:[%s0 + $0x8] sm:$0xff]
    %v31 = vld [vmem:[%s0 + $0x18] sm:$0xff]
    %v32 = vld [vmem:[%s0 + $0x20] sm:$0xff]
    %v33 = vld [vmem:[%s0 + $0xb] sm:$0xff]
    %v34 = vld [vmem:[%s0 + $0x23] sm:$0xff]
    %v35 = vld [vmem:[%s2] sm:$0xff]
    %36 = vxpose.xlu0.b32.start [1/16] %v29, 128
    %37 = vxpose.xlu0.b32.cont [2/16] %v30, 128
    %38 = vxpose.xlu0.b32.cont [3/16] 0.0, 128
    %39 = vxpose.xlu0.b32.cont [4/16] 0.0, 128
    %40 = vxpose.xlu0.b32.cont [5/16] 0.0, 128
    %41 = vxpose.xlu0.b32.cont [6/16] 0.0, 128
    %42 = vxpose.xlu0.b32.cont [7/16] 0.0, 128
    %43 = vxpose.xlu0.b32.cont [8/16] 0.0, 128
    %44 = vxpose.xlu0.b32.cont [9/16] 0.0, 128
    %45 = vxpose.xlu0.b32.cont [10/16] 0.0, 128
    %46 = vxpose.xlu0.b32.cont [11/16] 0.0, 128
    %47 = vxpose.xlu0.b32.cont [12/16] 0.0, 128
    %48 = vxpose.xlu0.b32.cont [13/16] 0.0, 128
    %49 = vxpose.xlu0.b32.cont [14/16] 0.0, 128
    %50 = vxpose.xlu0.b32.cont [15/16] 0.0, 128
    %51 = vxpose.xlu0.b32.end [16/16] 0.0, 128
    %v52 = vpop.trf.xlu0
    %v53 = vpop.trf.xlu0
    %v54 = vpop.trf.xlu0
    %v55 = vpop.trf.xlu0
    %v56 = vpop.trf.xlu0
    %v57 = vpop.trf.xlu0
    %v58 = vpop.trf.xlu0
    %v59 = vpop.trf.xlu0
    %v60 = vpop.trf.xlu0
    %v61 = vpop.trf.xlu0
    %v62 = vpop.trf.xlu0
    %v63 = vpop.trf.xlu0
    %v64 = vpop.trf.xlu0
    %v65 = vpop.trf.xlu0
    %v66 = vpop.trf.xlu0
    %v67 = vpop.trf.xlu0
    %68 = vxpose.xlu0.b32.start [1/16] %v31, 128
    %69 = vxpose.xlu0.b32.cont [2/16] %v32, 128
    %70 = vxpose.xlu0.b32.cont [3/16] 0.0, 128
    %71 = vxpose.xlu0.b32.cont [4/16] 0.0, 128
    %72 = vxpose.xlu0.b32.cont [5/16] 0.0, 128
    %73 = vxpose.xlu0.b32.cont [6/16] 0.0, 128
    %74 = vxpose.xlu0.b32.cont [7/16] 0.0, 128
    %75 = vxpose.xlu0.b32.cont [8/16] 0.0, 128
    %76 = vxpose.xlu0.b32.cont [9/16] 0.0, 128
    %77 = vxpose.xlu0.b32.cont [10/16] 0.0, 128
    %78 = vxpose.xlu0.b32.cont [11/16] 0.0, 128
    %79 = vxpose.xlu0.b32.cont [12/16] 0.0, 128
    %80 = vxpose.xlu0.b32.cont [13/16] 0.0, 128
    %81 = vxpose.xlu0.b32.cont [14/16] 0.0, 128
    %82 = vxpose.xlu0.b32.cont [15/16] 0.0, 128
    %83 = vxpose.xlu0.b32.end [16/16] 0.0, 128
    %v84 = vpop.trf.xlu0
    %v85 = vpop.trf.xlu0
    %v86 = vpop.trf.xlu0
    %v87 = vpop.trf.xlu0
    %v88 = vpop.trf.xlu0
    %v89 = vpop.trf.xlu0
    %v90 = vpop.trf.xlu0
    %v91 = vpop.trf.xlu0
    %v92 = vpop.trf.xlu0
    %v93 = vpop.trf.xlu0
    %v94 = vpop.trf.xlu0
    %v95 = vpop.trf.xlu0
    %v96 = vpop.trf.xlu0
    %v97 = vpop.trf.xlu0
    %v98 = vpop.trf.xlu0
    %v99 = vpop.trf.xlu0
    %100 = vxpose.xlu0.b32.start [1/16] %v33, 128
    %101 = vxpose.xlu0.b32.cont [2/16] 0.0, 128
    %102 = vxpose.xlu0.b32.cont [3/16] 0.0, 128
    %103 = vxpose.xlu0.b32.cont [4/16] 0.0, 128
    %104 = vxpose.xlu0.b32.cont [5/16] 0.0, 128
    %105 = vxpose.xlu0.b32.cont [6/16] 0.0, 128
    %106 = vxpose.xlu0.b32.cont [7/16] 0.0, 128
    %107 = vxpose.xlu0.b32.cont [8/16] 0.0, 128
    %108 = vxpose.xlu0.b32.cont [9/16] 0.0, 128
    %109 = vxpose.xlu0.b32.cont [10/16] 0.0, 128
    %110 = vxpose.xlu0.b32.cont [11/16] 0.0, 128
    %111 = vxpose.xlu0.b32.cont [12/16] 0.0, 128
    %112 = vxpose.xlu0.b32.cont [13/16] 0.0, 128
    %113 = vxpose.xlu0.b32.cont [14/16] 0.0, 128
    %114 = vxpose.xlu0.b32.cont [15/16] 0.0, 128
    %115 = vxpose.xlu0.b32.end [16/16] 0.0, 128
    %v116 = vpop.trf.xlu0
    %v117 = vpop.trf.xlu0
    %v118 = vpop.trf.xlu0
    %v119 = vpop.trf.xlu0
    %v120 = vpop.trf.xlu0
    %v121 = vpop.trf.xlu0
    %v122 = vpop.trf.xlu0
    %v123 = vpop.trf.xlu0
    %v124 = vpop.trf.xlu0
    %v125 = vpop.trf.xlu0
    %v126 = vpop.trf.xlu0
    %v127 = vpop.trf.xlu0
    %v128 = vpop.trf.xlu0
    %v129 = vpop.trf.xlu0
    %v130 = vpop.trf.xlu0
    %v131 = vpop.trf.xlu0
    %132 = vxpose.xlu0.b32.start [1/16] %v34, 128
    %133 = vxpose.xlu0.b32.cont [2/16] 0.0, 128
    %134 = vxpose.xlu0.b32.cont [3/16] 0.0, 128
    %135 = vxpose.xlu0.b32.cont [4/16] 0.0, 128
    %136 = vxpose.xlu0.b32.cont [5/16] 0.0, 128
    %137 = vxpose.xlu0.b32.cont [6/16] 0.0, 128
    %138 = vxpose.xlu0.b32.cont [7/16] 0.0, 128
    %139 = vxpose.xlu0.b32.cont [8/16] 0.0, 128
    %140 = vxpose.xlu0.b32.cont [9/16] 0.0, 128
    %141 = vxpose.xlu0.b32.cont [10/16] 0.0, 128
    %142 = vxpose.xlu0.b32.cont [11/16] 0.0, 128
    %143 = vxpose.xlu0.b32.cont [12/16] 0.0, 128
    %144 = vxpose.xlu0.b32.cont [13/16] 0.0, 128
    %145 = vxpose.xlu0.b32.cont [14/16] 0.0, 128
    %146 = vxpose.xlu0.b32.cont [15/16] 0.0, 128
    %147 = vxpose.xlu0.b32.end [16/16] 0.0, 128
    %v148 = vpop.trf.xlu0
    %v149 = vpop.trf.xlu0
    %v150 = vpop.trf.xlu0
    %v151 = vpop.trf.xlu0
    %v152 = vpop.trf.xlu0
    %v153 = vpop.trf.xlu0
    %v154 = vpop.trf.xlu0
    %v155 = vpop.trf.xlu0
    %v156 = vpop.trf.xlu0
    %v157 = vpop.trf.xlu0
    %v158 = vpop.trf.xlu0
    %v159 = vpop.trf.xlu0
    %v160 = vpop.trf.xlu0
    %v161 = vpop.trf.xlu0
    %v162 = vpop.trf.xlu0
    %v163 = vpop.trf.xlu0
    %v164 = vld [vmem:[#allocation2] sm:$0xf]
    %v165 = vld [vmem:[#allocation2 + $0x4] sm:$0xf]
    %v166 = vpack.c.bf16 %v84, %v52
    %v167 = vlaneseq
    %v168 = vshrl.u32 %v167, 7
    %v169 = vsub.s32 0, %v168
    %v170 = vrot.slane %v35, %v169
    %v173 = vunpack.c.l.b16 %v164
    %v174 = vunpack.c.l.b16 %v165
    %v175 = vpack.c.b16 %v174, %v173
    %vm177 = vcmask 130048
    %v179 = vsel %vm177, %v166, 0
    %181 = vmatprep.subr.bf16.mxu0 0
    %182 = vmatpush1.bf16.msra.mxu0 %v175
    %183 = vmatprep.subr.bf16.mxu0 0
    %184 = vmatpush1.bf16.msra.mxu0 0
    %185 = vmatprep.subr.bf16.mxu0 0
    %186 = vmatpush1.bf16.msra.mxu0 0
    %187 = vmatprep.subr.bf16.mxu0 0
    %188 = vmatpush1.bf16.msra.mxu0 0
    %189 = vmatprep.subr.bf16.mxu0 0
    %190 = vmatpush1.bf16.msra.mxu0 0
    %191 = vmatprep.subr.bf16.mxu0 0
    %192 = vmatpush1.bf16.msra.mxu0 0
    %193 = vmatprep.subr.bf16.mxu0 0
    %194 = vmatpush1.bf16.msra.mxu0 0
    %195 = vmatprep.subr.bf16.mxu0 0
    %196 = vmatpush1.bf16.msra.mxu0 0
    %197 = vmatprep.subr.bf16.mxu0 0
    %198 = vmatpush1.bf16.msra.mxu0 0
    %199 = vmatprep.subr.bf16.mxu0 0
    %200 = vmatpush1.bf16.msra.mxu0 0
    %201 = vmatprep.subr.bf16.mxu0 0
    %202 = vmatpush1.bf16.msra.mxu0 0
    %203 = vmatprep.subr.bf16.mxu0 0
    %204 = vmatpush1.bf16.msra.mxu0 0
    %205 = vmatprep.subr.bf16.mxu0 0
    %206 = vmatpush1.bf16.msra.mxu0 0
    %207 = vmatprep.subr.bf16.mxu0 0
    %208 = vmatpush1.bf16.msra.mxu0 0
    %209 = vmatprep.subr.bf16.mxu0 0
    %210 = vmatpush1.bf16.msra.mxu0 0
    %211 = vmatprep.subr.bf16.mxu0 0
    %212 = vmatpush1.bf16.msra.mxu0 0
    %213 = vmatprep.mubr.bf16.mxu0 0
    %214 = vmatmul.mubr.bf16.gmra.mrb[0].mxu0 %v179
    %v215 = vpop.f32.mrb[0].mxu0
    %v216 = vadd.f32 %v170, %v215
    %v217 = vpop.f32.mrb[0].mxu0
    %v218 = vpop.f32.mrb[0].mxu0
    %v219 = vadd.f32 %v170, %v218
    %v220 = vpop.f32.mrb[0].mxu0
    %221 = vdwg.mxu0
    %v222 = vmax.f32 %v216, 0.0
    %v223 = vmax.f32 %v219, 0.0
    %v224 = vld [vmem:[#allocation2 + $0x8] sm:$0xf]
    %v225 = vld [vmem:[#allocation2 + $0xc] sm:$0xf]
    %v226 = vld [vmem:[#allocation2 + $0x10] sm:$0xf]
    %v227 = vld [vmem:[#allocation2 + $0x14] sm:$0xf]
    %v228 = vld [vmem:[#allocation2 + $0x18] sm:$0xf]
    %v229 = vld [vmem:[#allocation2 + $0x1c] sm:$0xf]
    %v230 = vld [vmem:[#allocation2 + $0x20] sm:$0xf]
    %v231 = vld [vmem:[#allocation2 + $0x24] sm:$0xf]
    %v232 = vpack.c.bf16 %v223, %v222
    %v233 = vlaneseq
    %v234 = vshrl.u32 %v233, 7
    %v235 = vsub.s32 1, %v234
    %v236 = vrot.slane %v35, %v235
    %v245 = vunpack.c.l.b16 %v224
    %v246 = vunpack.c.l.b16 %v225
    %v247 = vunpack.c.l.b16 %v226
    %v248 = vunpack.c.l.b16 %v227
    %v249 = vunpack.c.l.b16 %v228
    %v250 = vunpack.c.l.b16 %v229
    %v251 = vunpack.c.l.b16 %v230
    %v252 = vunpack.c.l.b16 %v231
    %v253 = vpack.c.b16 %v246, %v245
    %v254 = vpack.c.b16 %v248, %v247
    %v255 = vpack.c.b16 %v250, %v249
    %v256 = vpack.c.b16 %v252, %v251
    %vm261 = vcmask 523264
    %v263 = vsel %vm261, %v232, 0
    %265 = vmatprep.subr.bf16.mxu0 0
    %266 = vmatpush1.bf16.msra.mxu0 %v253
    %267 = vmatprep.subr.bf16.mxu0 0
    %268 = vmatpush1.bf16.msra.mxu0 %v254
    %269 = vmatprep.subr.bf16.mxu0 0
    %270 = vmatpush1.bf16.msra.mxu0 %v255
    %271 = vmatprep.subr.bf16.mxu0 0
    %272 = vmatpush1.bf16.msra.mxu0 %v256
    %273 = vmatprep.subr.bf16.mxu0 0
    %274 = vmatpush1.bf16.msra.mxu0 0
    %275 = vmatprep.subr.bf16.mxu0 0
    %276 = vmatpush1.bf16.msra.mxu0 0
    %277 = vmatprep.subr.bf16.mxu0 0
    %278 = vmatpush1.bf16.msra.mxu0 0
    %279 = vmatprep.subr.bf16.mxu0 0
    %280 = vmatpush1.bf16.msra.mxu0 0
    %281 = vmatprep.subr.bf16.mxu0 0
    %282 = vmatpush1.bf16.msra.mxu0 0
    %283 = vmatprep.subr.bf16.mxu0 0
    %284 = vmatpush1.bf16.msra.mxu0 0
    %285 = vmatprep.subr.bf16.mxu0 0
    %286 = vmatpush1.bf16.msra.mxu0 0
    %287 = vmatprep.subr.bf16.mxu0 0
    %288 = vmatpush1.bf16.msra.mxu0 0
    %289 = vmatprep.subr.bf16.mxu0 0
    %290 = vmatpush1.bf16.msra.mxu0 0
    %291 = vmatprep.subr.bf16.mxu0 0
    %292 = vmatpush1.bf16.msra.mxu0 0
    %293 = vmatprep.subr.bf16.mxu0 0
    %294 = vmatpush1.bf16.msra.mxu0 0
    %295 = vmatprep.subr.bf16.mxu0 0
    %296 = vmatpush1.bf16.msra.mxu0 0
    %297 = vmatprep.mubr.bf16.mxu0 0
    %298 = vmatmul.mubr.bf16.gmra.mrb[0].mxu0 %v263
    %v299 = vpop.f32.mrb[0].mxu0
    %v300 = vadd.f32 %v236, %v299
    %v301 = vpop.f32.mrb[0].mxu0
    %v302 = vpop.f32.mrb[0].mxu0
    %v303 = vadd.f32 %v236, %v302
    %v304 = vpop.f32.mrb[0].mxu0
    %305 = vdwg.mxu0
    %v306 = vmax.f32 %v300, 0.0
    %v307 = vmax.f32 %v303, 0.0
    %v308 = vld [vmem:[#allocation2 + $0x28] sm:$0xf]
    %v309 = vld [vmem:[#allocation2 + $0x2c] sm:$0xf]
    %v310 = vld [vmem:[#allocation2 + $0x30] sm:$0xf]
    %v311 = vld [vmem:[#allocation2 + $0x34] sm:$0xf]
    %v312 = vpack.c.bf16 %v307, %v306
    %v313 = vlaneseq
    %v314 = vshrl.u32 %v313, 7
    %v315 = vsub.s32 2, %v314
    %v316 = vrot.slane %v35, %v315
    %v321 = vunpack.c.l.b16 %v308
    %v322 = vunpack.c.l.b16 %v309
    %v323 = vunpack.c.l.b16 %v310
    %v324 = vunpack.c.l.b16 %v311
    %v325 = vpack.c.b16 %v322, %v321
    %v326 = vpack.c.b16 %v324, %v323
    %vm329 = vcmask 261120
    %v331 = vsel %vm329, %v312, 0
    %333 = vmatprep.subr.bf16.mxu0 0
    %334 = vmatpush1.bf16.msra.mxu0 %v325
    %335 = vmatprep.subr.bf16.mxu0 0
    %336 = vmatpush1.bf16.msra.mxu0 %v326
    %337 = vmatprep.subr.bf16.mxu0 0
    %338 = vmatpush1.bf16.msra.mxu0 0
    %339 = vmatprep.subr.bf16.mxu0 0
    %340 = vmatpush1.bf16.msra.mxu0 0
    %341 = vmatprep.subr.bf16.mxu0 0
    %342 = vmatpush1.bf16.msra.mxu0 0
    %343 = vmatprep.subr.bf16.mxu0 0
    %344 = vmatpush1.bf16.msra.mxu0 0
    %345 = vmatprep.subr.bf16.mxu0 0
    %346 = vmatpush1.bf16.msra.mxu0 0
    %347 = vmatprep.subr.bf16.mxu0 0
    %348 = vmatpush1.bf16.msra.mxu0 0
    %349 = vmatprep.subr.bf16.mxu0 0
    %350 = vmatpush1.bf16.msra.mxu0 0
    %351 = vmatprep.subr.bf16.mxu0 0
    %352 = vmatpush1.bf16.msra.mxu0 0
    %353 = vmatprep.subr.bf16.mxu0 0
    %354 = vmatpush1.bf16.msra.mxu0 0
    %355 = vmatprep.subr.bf16.mxu0 0
    %356 = vmatpush1.bf16.msra.mxu0 0
    %357 = vmatprep.subr.bf16.mxu0 0
    %358 = vmatpush1.bf16.msra.mxu0 0
    %359 = vmatprep.subr.bf16.mxu0 0
    %360 = vmatpush1.bf16.msra.mxu0 0
    %361 = vmatprep.subr.bf16.mxu0 0
    %362 = vmatpush1.bf16.msra.mxu0 0
    %363 = vmatprep.subr.bf16.mxu0 0
    %364 = vmatpush1.bf16.msra.mxu0 0
    %365 = vmatprep.mubr.bf16.mxu0 0
    %366 = vmatmul.mubr.bf16.gmra.mrb[0].mxu0 %v331
    %v367 = vpop.f32.mrb[0].mxu0
    %v368 = vadd.f32 %v316, %v367
    %v369 = vpop.f32.mrb[0].mxu0
    %v370 = vpop.f32.mrb[0].mxu0
    %v371 = vadd.f32 %v316, %v370
    %v372 = vpop.f32.mrb[0].mxu0
    %373 = vdwg.mxu0
    %v374 = vmax.f32 %v368, 0.0
    %v375 = vmax.f32 %v371, 0.0
    %v376 = vld [vmem:[#allocation2 + $0x38] sm:$0xf]
    %v377 = vpack.c.bf16 %v375, %v374
    %v378 = vld [vmem:[#allocation2 + $0x3c] sm:$0xf]
    %v379 = vpack.c.bf16 %v148, %v116
    %vm380 = vcmask 64512
    %v382 = vsel %vm380, %v379, 0
    %vm384 = vcmask 1043456
    %v386 = vsel %vm384, %v378, 0
    %388 = vmatprep.subr.bf16.mxu0 0
    %389 = vmatpush1.bf16.msra.mxu0 %v386
    %390 = vmatprep.subr.bf16.mxu0 0
    %391 = vmatpush1.bf16.msra.mxu0 0
    %392 = vmatprep.subr.bf16.mxu0 0
    %393 = vmatpush1.bf16.msra.mxu0 0
    %394 = vmatprep.subr.bf16.mxu0 0
    %395 = vmatpush1.bf16.msra.mxu0 0
    %396 = vmatprep.subr.bf16.mxu0 0
    %397 = vmatpush1.bf16.msra.mxu0 0
    %398 = vmatprep.subr.bf16.mxu0 0
    %399 = vmatpush1.bf16.msra.mxu0 0
    %400 = vmatprep.subr.bf16.mxu0 0
    %401 = vmatpush1.bf16.msra.mxu0 0
    %402 = vmatprep.subr.bf16.mxu0 0
    %403 = vmatpush1.bf16.msra.mxu0 0
    %404 = vmatprep.subr.bf16.mxu0 0
    %405 = vmatpush1.bf16.msra.mxu0 0
    %406 = vmatprep.subr.bf16.mxu0 0
    %407 = vmatpush1.bf16.msra.mxu0 0
    %408 = vmatprep.subr.bf16.mxu0 0
    %409 = vmatpush1.bf16.msra.mxu0 0
    %410 = vmatprep.subr.bf16.mxu0 0
    %411 = vmatpush1.bf16.msra.mxu0 0
    %412 = vmatprep.subr.bf16.mxu0 0
    %413 = vmatpush1.bf16.msra.mxu0 0
    %414 = vmatprep.subr.bf16.mxu0 0
    %415 = vmatpush1.bf16.msra.mxu0 0
    %416 = vmatprep.subr.bf16.mxu0 0
    %417 = vmatpush1.bf16.msra.mxu0 0
    %418 = vmatprep.subr.bf16.mxu0 0
    %419 = vmatpush1.bf16.msra.mxu0 0
    %420 = vmatprep.mubr.bf16.mxu0 0
    %421 = vmatmul.mubr.bf16.gmra.mrb[0].mxu0 %v382
    %v422 = vpop.f32.mrb[0].mxu0
    %v423 = vadd.f32 0.0, %v422
    %v424 = vpop.f32.mrb[0].mxu0
    %v425 = vpop.f32.mrb[0].mxu0
    %v426 = vadd.f32 0.0, %v425
    %v427 = vpop.f32.mrb[0].mxu0
    %428 = vdwg.mxu0
    %v430 = vsel %vm380, %v377, 0
    %v433 = vsel %vm384, %v376, 0
    %435 = vmatprep.subr.bf16.mxu0 0
    %436 = vmatpush1.bf16.msra.mxu0 %v433
    %437 = vmatprep.subr.bf16.mxu0 0
    %438 = vmatpush1.bf16.msra.mxu0 0
    %439 = vmatprep.subr.bf16.mxu0 0
    %440 = vmatpush1.bf16.msra.mxu0 0
    %441 = vmatprep.subr.bf16.mxu0 0
    %442 = vmatpush1.bf16.msra.mxu0 0
    %443 = vmatprep.subr.bf16.mxu0 0
    %444 = vmatpush1.bf16.msra.mxu0 0
    %445 = vmatprep.subr.bf16.mxu0 0
    %446 = vmatpush1.bf16.msra.mxu0 0
    %447 = vmatprep.subr.bf16.mxu0 0
    %448 = vmatpush1.bf16.msra.mxu0 0
    %449 = vmatprep.subr.bf16.mxu0 0
    %450 = vmatpush1.bf16.msra.mxu0 0
    %451 = vmatprep.subr.bf16.mxu0 0
    %452 = vmatpush1.bf16.msra.mxu0 0
    %453 = vmatprep.subr.bf16.mxu0 0
    %454 = vmatpush1.bf16.msra.mxu0 0
    %455 = vmatprep.subr.bf16.mxu0 0
    %456 = vmatpush1.bf16.msra.mxu0 0
    %457 = vmatprep.subr.bf16.mxu0 0
    %458 = vmatpush1.bf16.msra.mxu0 0
    %459 = vmatprep.subr.bf16.mxu0 0
    %460 = vmatpush1.bf16.msra.mxu0 0
    %461 = vmatprep.subr.bf16.mxu0 0
    %462 = vmatpush1.bf16.msra.mxu0 0
    %463 = vmatprep.subr.bf16.mxu0 0
    %464 = vmatpush1.bf16.msra.mxu0 0
    %465 = vmatprep.subr.bf16.mxu0 0
    %466 = vmatpush1.bf16.msra.mxu0 0
    %467 = vmatprep.mubr.bf16.mxu0 0
    %468 = vmatmul.mubr.bf16.gmra.mrb[0].mxu0 %v430
    %v469 = vpop.f32.mrb[0].mxu0
    %v470 = vadd.f32 %v423, %v469
    %v471 = vpop.f32.mrb[0].mxu0
    %v472 = vpop.f32.mrb[0].mxu0
    %v473 = vadd.f32 %v426, %v472
    %v474 = vpop.f32.mrb[0].mxu0
    %475 = vdwg.mxu0
    %v476 = vlaneseq
    %v477 = vshrl.u32 %v476, 7
    %v478 = vsub.s32 3, %v477
    %v479 = vrot.slane %v35, %v478
    %v480 = vadd.f32 %v470, %v479
    %v481 = vadd.f32 %v473, %v479
    %v482 = vmax.f32 %v480, 0.0
    %v483 = vmax.f32 %v481, 0.0
    %v484 = vld [vmem:[#allocation2 + $0x40] sm:$0xf]
    %v485 = vld [vmem:[#allocation2 + $0x44] sm:$0xf]
    %v486 = vpack.c.bf16 %v483, %v482
    %v487 = vlaneseq
    %v488 = vshrl.u32 %v487, 7
    %v489 = vsub.s32 4, %v488
    %v490 = vrot.slane %v35, %v489
    %v493 = vunpack.c.l.b16 %v484
    %v494 = vunpack.c.l.b16 %v485
    %v495 = vpack.c.b16 %v494, %v493
    %v498 = vsel %vm177, %v486, 0
    %500 = vmatprep.subr.bf16.mxu0 0
    %501 = vmatpush1.bf16.msra.mxu0 %v495
    %502 = vmatprep.subr.bf16.mxu0 0
    %503 = vmatpush1.bf16.msra.mxu0 0
    %504 = vmatprep.subr.bf16.mxu0 0
    %505 = vmatpush1.bf16.msra.mxu0 0
    %506 = vmatprep.subr.bf16.mxu0 0
    %507 = vmatpush1.bf16.msra.mxu0 0
    %508 = vmatprep.subr.bf16.mxu0 0
    %509 = vmatpush1.bf16.msra.mxu0 0
    %510 = vmatprep.subr.bf16.mxu0 0
    %511 = vmatpush1.bf16.msra.mxu0 0
    %512 = vmatprep.subr.bf16.mxu0 0
    %513 = vmatpush1.bf16.msra.mxu0 0
    %514 = vmatprep.subr.bf16.mxu0 0
    %515 = vmatpush1.bf16.msra.mxu0 0
    %516 = vmatprep.subr.bf16.mxu0 0
    %517 = vmatpush1.bf16.msra.mxu0 0
    %518 = vmatprep.subr.bf16.mxu0 0
    %519 = vmatpush1.bf16.msra.mxu0 0
    %520 = vmatprep.subr.bf16.mxu0 0
    %521 = vmatpush1.bf16.msra.mxu0 0
    %522 = vmatprep.subr.bf16.mxu0 0
    %523 = vmatpush1.bf16.msra.mxu0 0
    %524 = vmatprep.subr.bf16.mxu0 0
    %525 = vmatpush1.bf16.msra.mxu0 0
    %526 = vmatprep.subr.bf16.mxu0 0
    %527 = vmatpush1.bf16.msra.mxu0 0
    %528 = vmatprep.subr.bf16.mxu0 0
    %529 = vmatpush1.bf16.msra.mxu0 0
    %530 = vmatprep.subr.bf16.mxu0 0
    %531 = vmatpush1.bf16.msra.mxu0 0
    %532 = vmatprep.mubr.bf16.mxu0 0
    %533 = vmatmul.mubr.bf16.gmra.mrb[0].mxu0 %v498
    %v534 = vpop.f32.mrb[0].mxu0
    %v535 = vadd.f32 %v490, %v534
    %v536 = vpop.f32.mrb[0].mxu0
    %v537 = vpop.f32.mrb[0].mxu0
    %v538 = vadd.f32 %v490, %v537
    %v539 = vpop.f32.mrb[0].mxu0
    %540 = vdwg.mxu0
    %v541 = vld [vmem:[#allocation2 + $0x48] sm:$0xf]
    %v542 = vld [vmem:[#allocation2 + $0x4c] sm:$0xf]
    %v543 = vld [vmem:[#allocation2 + $0x50] sm:$0xf]
    %v544 = vld [vmem:[#allocation2 + $0x54] sm:$0xf]
    %v545 = vld [vmem:[#allocation2 + $0x68] sm:$0xf]
    %v546 = vld [vmem:[#allocation2 + $0x6c] sm:$0xf]
    %v547 = vld [vmem:[#allocation2 + $0x70] sm:$0xf]
    %v548 = vld [vmem:[#allocation2 + $0x74] sm:$0xf]
    %v549 = vld [vmem:[#allocation2 + $0x58] sm:$0xf]
    %v550 = vld [vmem:[#allocation2 + $0x5c] sm:$0xf]
    %v551 = vld [vmem:[#allocation2 + $0x60] sm:$0xf]
    %v552 = vld [vmem:[#allocation2 + $0x64] sm:$0xf]
    %v553 = vlaneseq
    %v554 = vand.u32 %v553, 127
    %vm555 = vcmp.ge.s32.totalorder %v554, 64
    %vm556 = vcmp.lt.s32.totalorder %v554, 96
    %vm557 = vmand %vm555, %vm556
    %v558 = vsel %vm557, 1.0, 0.5
    %v559 = vsel %vm557, 0.0, 0.5
    %v560 = vmul.f32 %v535, %v558
    %v561 = vmul.f32 %v538, %v558
    %v562 = vtanh.pop %v560
    %v563 = vtanh.pop %v561
    %v564 = vmul.f32 %v562, %v558
    %v565 = vmul.f32 %v563, %v558
    %v566 = vadd.f32 %v564, %v559
    %v567 = vadd.f32 %v565, %v559
    %v568 = vmul.f32 %v566, 0.0
    %v569 = vmul.f32 %v567, 0.0
    %572 = vrot.lane.b32.xlu0 %v566, 64
    %v573 = vpop.permute.xlu0 %572
    %574 = vrot.lane.b32.xlu0 %v567, 64
    %v575 = vpop.permute.xlu0 %574
    %v578 = vmul.f32 %v566, %v573
    %v579 = vmul.f32 %v567, %v575
    %582 = vrot.lane.b32.xlu0 %v578, 32
    %v583 = vpop.permute.xlu0 %582
    %584 = vrot.lane.b32.xlu0 %v579, 32
    %v585 = vpop.permute.xlu0 %584
    %v588 = vadd.f32 %v568, %v583
    %v589 = vadd.f32 %v569, %v585
    %v590 = vtanh.pop %v588
    %v591 = vtanh.pop %v589
    %594 = vrot.lane.b32.xlu0 %v590, 64
    %v595 = vpop.permute.xlu0 %594
    %596 = vrot.lane.b32.xlu0 %v591, 64
    %v597 = vpop.permute.xlu0 %596
    %v600 = vmul.f32 %v566, %v595
    %v601 = vmul.f32 %v567, %v597
    %v602 = vpack.c.bf16 %v600, %v600
    %v603 = vpack.c.bf16 %v601, %v601
    %v604 = vlaneseq
    %v605 = vshrl.u32 %v604, 7
    %v606 = vsub.s32 5, %v605
    %v607 = vrot.slane %v35, %v606
    %v610 = vunpack.c.l.b16 %v602
    %v611 = vunpack.c.l.b16 %v603
    %v612 = vrot.slane %v611, 7
    %vm613 = vcmask 1041409
    %v614 = vsel %vm613, %v612, %v610
    %v615 = vpack.c.b16 %v614, %v614
    %616 = vrot.lane.b32.xlu0 %v615, 32
    %v617 = vpop.permute.xlu0 %616
    %v622 = vunpack.c.l.b16 %v549
    %v623 = vunpack.c.l.b16 %v550
    %v624 = vunpack.c.l.b16 %v551
    %v625 = vunpack.c.l.b16 %v552
    %v626 = vpack.c.b16 %v623, %v622
    %v627 = vpack.c.b16 %v625, %v624
    %v631 = vsel %vm329, %v617, 0
    %633 = vmatprep.subr.bf16.mxu0 0
    %634 = vmatpush1.bf16.msra.mxu0 %v626
    %635 = vmatprep.subr.bf16.mxu0 0
    %636 = vmatpush1.bf16.msra.mxu0 %v627
    %637 = vmatprep.subr.bf16.mxu0 0
    %638 = vmatpush1.bf16.msra.mxu0 0
    %639 = vmatprep.subr.bf16.mxu0 0
    %640 = vmatpush1.bf16.msra.mxu0 0
    %641 = vmatprep.subr.bf16.mxu0 0
    %642 = vmatpush1.bf16.msra.mxu0 0
    %643 = vmatprep.subr.bf16.mxu0 0
    %644 = vmatpush1.bf16.msra.mxu0 0
    %645 = vmatprep.subr.bf16.mxu0 0
    %646 = vmatpush1.bf16.msra.mxu0 0
    %647 = vmatprep.subr.bf16.mxu0 0
    %648 = vmatpush1.bf16.msra.mxu0 0
    %649 = vmatprep.subr.bf16.mxu0 0
    %650 = vmatpush1.bf16.msra.mxu0 0
    %651 = vmatprep.subr.bf16.mxu0 0
    %652 = vmatpush1.bf16.msra.mxu0 0
    %653 = vmatprep.subr.bf16.mxu0 0
    %654 = vmatpush1.bf16.msra.mxu0 0
    %655 = vmatprep.subr.bf16.mxu0 0
    %656 = vmatpush1.bf16.msra.mxu0 0
    %657 = vmatprep.subr.bf16.mxu0 0
    %658 = vmatpush1.bf16.msra.mxu0 0
    %659 = vmatprep.subr.bf16.mxu0 0
    %660 = vmatpush1.bf16.msra.mxu0 0
    %661 = vmatprep.subr.bf16.mxu0 0
    %662 = vmatpush1.bf16.msra.mxu0 0
    %663 = vmatprep.subr.bf16.mxu0 0
    %664 = vmatpush1.bf16.msra.mxu0 0
    %665 = vmatprep.mubr.bf16.mxu0 0
    %666 = vmatmul.mubr.bf16.gmra.mrb[0].mxu0 %v631
    %v667 = vpop.f32.mrb[0].mxu0
    %v668 = vadd.f32 %v607, %v667
    %v669 = vpop.f32.mrb[0].mxu0
    %v670 = vpop.f32.mrb[0].mxu0
    %v671 = vpop.f32.mrb[0].mxu0
    %672 = vdwg.mxu0
    %v673 = vmul.f32 %v668, %v558
    %v674 = vtanh.pop %v673
    %v675 = vmul.f32 %v674, %v558
    %v676 = vadd.f32 %v675, %v559
    %v677 = vmul.f32 %v676, 0.0
    %679 = vrot.lane.b32.xlu0 %v676, 64
    %v680 = vpop.permute.xlu0 %679
    %v682 = vmul.f32 %v676, %v680
    %684 = vrot.lane.b32.xlu0 %v682, 32
    %v685 = vpop.permute.xlu0 %684
    %v687 = vadd.f32 %v677, %v685
    %v688 = vtanh.pop %v687
    %690 = vrot.lane.b32.xlu0 %v688, 64
    %v691 = vpop.permute.xlu0 %690
    %v693 = vmul.f32 %v676, %v691
    %v698 = vunpack.c.l.b16 %v541
    %v699 = vunpack.c.l.b16 %v542
    %v700 = vunpack.c.l.b16 %v543
    %v701 = vunpack.c.l.b16 %v544
    %v702 = vpack.c.b16 %v699, %v698
    %v703 = vpack.c.b16 %v701, %v700
    %706 = vmatprep.subr.bf16.mxu0 0
    %707 = vmatpush1.bf16.msra.mxu0 %v702
    %708 = vmatprep.subr.bf16.mxu0 0
    %709 = vmatpush1.bf16.msra.mxu0 %v703
    %710 = vmatprep.subr.bf16.mxu0 0
    %711 = vmatpush1.bf16.msra.mxu0 0
    %712 = vmatprep.subr.bf16.mxu0 0
    %713 = vmatpush1.bf16.msra.mxu0 0
    %714 = vmatprep.subr.bf16.mxu0 0
    %715 = vmatpush1.bf16.msra.mxu0 0
    %716 = vmatprep.subr.bf16.mxu0 0
    %717 = vmatpush1.bf16.msra.mxu0 0
    %718 = vmatprep.subr.bf16.mxu0 0
    %719 = vmatpush1.bf16.msra.mxu0 0
    %720 = vmatprep.subr.bf16.mxu0 0
    %721 = vmatpush1.bf16.msra.mxu0 0
    %722 = vmatprep.subr.bf16.mxu0 0
    %723 = vmatpush1.bf16.msra.mxu0 0
    %724 = vmatprep.subr.bf16.mxu0 0
    %725 = vmatpush1.bf16.msra.mxu0 0
    %726 = vmatprep.subr.bf16.mxu0 0
    %727 = vmatpush1.bf16.msra.mxu0 0
    %728 = vmatprep.subr.bf16.mxu0 0
    %729 = vmatpush1.bf16.msra.mxu0 0
    %730 = vmatprep.subr.bf16.mxu0 0
    %731 = vmatpush1.bf16.msra.mxu0 0
    %732 = vmatprep.subr.bf16.mxu0 0
    %733 = vmatpush1.bf16.msra.mxu0 0
    %734 = vmatprep.subr.bf16.mxu0 0
    %735 = vmatpush1.bf16.msra.mxu0 0
    %736 = vmatprep.subr.bf16.mxu0 0
    %737 = vmatpush1.bf16.msra.mxu0 0
    %738 = vmatprep.mubr.bf16.mxu0 0
    %739 = vmatmul.mubr.bf16.gmra.mrb[0].mxu0 %v631
    %v740 = vpop.f32.mrb[0].mxu0
    %v741 = vadd.f32 0.0, %v740
    %v742 = vpop.f32.mrb[0].mxu0
    %v743 = vpop.f32.mrb[0].mxu0
    %v744 = vpop.f32.mrb[0].mxu0
    %745 = vdwg.mxu0
    %v746 = vpack.c.bf16 %v693, %v693
    %748 = vrot.lane.b32.xlu0 %v746, 32
    %v749 = vpop.permute.xlu0 %748
    %v754 = vunpack.c.l.b16 %v545
    %v755 = vunpack.c.l.b16 %v546
    %v756 = vunpack.c.l.b16 %v547
    %v757 = vunpack.c.l.b16 %v548
    %v758 = vpack.c.b16 %v755, %v754
    %v759 = vpack.c.b16 %v757, %v756
    %v763 = vsel %vm329, %v749, 0
    %765 = vmatprep.subr.bf16.mxu0 0
    %766 = vmatpush1.bf16.msra.mxu0 %v758
    %767 = vmatprep.subr.bf16.mxu0 0
    %768 = vmatpush1.bf16.msra.mxu0 %v759
    %769 = vmatprep.subr.bf16.mxu0 0
    %770 = vmatpush1.bf16.msra.mxu0 0
    %771 = vmatprep.subr.bf16.mxu0 0
    %772 = vmatpush1.bf16.msra.mxu0 0
    %773 = vmatprep.subr.bf16.mxu0 0
    %774 = vmatpush1.bf16.msra.mxu0 0
    %775 = vmatprep.subr.bf16.mxu0 0
    %776 = vmatpush1.bf16.msra.mxu0 0
    %777 = vmatprep.subr.bf16.mxu0 0
    %778 = vmatpush1.bf16.msra.mxu0 0
    %779 = vmatprep.subr.bf16.mxu0 0
    %780 = vmatpush1.bf16.msra.mxu0 0
    %781 = vmatprep.subr.bf16.mxu0 0
    %782 = vmatpush1.bf16.msra.mxu0 0
    %783 = vmatprep.subr.bf16.mxu0 0
    %784 = vmatpush1.bf16.msra.mxu0 0
    %785 = vmatprep.subr.bf16.mxu0 0
    %786 = vmatpush1.bf16.msra.mxu0 0
    %787 = vmatprep.subr.bf16.mxu0 0
    %788 = vmatpush1.bf16.msra.mxu0 0
    %789 = vmatprep.subr.bf16.mxu0 0
    %790 = vmatpush1.bf16.msra.mxu0 0
    %791 = vmatprep.subr.bf16.mxu0 0
    %792 = vmatpush1.bf16.msra.mxu0 0
    %793 = vmatprep.subr.bf16.mxu0 0
    %794 = vmatpush1.bf16.msra.mxu0 0
    %795 = vmatprep.subr.bf16.mxu0 0
    %796 = vmatpush1.bf16.msra.mxu0 0
    %797 = vmatprep.mubr.bf16.mxu0 0
    %798 = vmatmul.mubr.bf16.gmra.mrb[0].mxu0 %v763
    %v799 = vpop.f32.mrb[0].mxu0
    %v800 = vadd.f32 0.0, %v799
    %v801 = vpop.f32.mrb[0].mxu0
    %v802 = vpop.f32.mrb[0].mxu0
    %v803 = vpop.f32.mrb[0].mxu0
    %804 = vdwg.mxu0
    %v806 = vrot.slane %v741, 7
    %v809 = vadd.f32 %v535, %v806
    %v810 = vadd.f32 %v538, %v741
    %v811 = vmul.f32 %v809, %v558
    %v812 = vmul.f32 %v810, %v558
    %v813 = vtanh.pop %v811
    %v814 = vtanh.pop %v812
    %v815 = vmul.f32 %v813, %v558
    %v816 = vmul.f32 %v814, %v558
    %v817 = vadd.f32 %v815, %v559
    %v818 = vadd.f32 %v816, %v559
    %v821 = vrot.slane %v588, 7
    %v822 = vrot.slane %v589, 7
    %v825 = vmul.f32 %v817, %v821
    %v826 = vmul.f32 %v818, %v822
    %829 = vrot.lane.b32.xlu0 %v817, 64
    %v830 = vpop.permute.xlu0 %829
    %831 = vrot.lane.b32.xlu0 %v818, 64
    %v832 = vpop.permute.xlu0 %831
    %v835 = vmul.f32 %v817, %v830
    %v836 = vmul.f32 %v818, %v832
    %839 = vrot.lane.b32.xlu0 %v835, 32
    %v840 = vpop.permute.xlu0 %839
    %841 = vrot.lane.b32.xlu0 %v836, 32
    %v842 = vpop.permute.xlu0 %841
    %v845 = vadd.f32 %v825, %v840
    %v846 = vadd.f32 %v826, %v842
    %v847 = vtanh.pop %v845
    %v848 = vtanh.pop %v846
    %851 = vrot.lane.b32.xlu0 %v847, 64
    %v852 = vpop.permute.xlu0 %851
    %853 = vrot.lane.b32.xlu0 %v848, 64
    %v854 = vpop.permute.xlu0 %853
    %v857 = vmul.f32 %v817, %v852
    %v858 = vmul.f32 %v818, %v854
    %v859 = vpack.c.bf16 %v857, %v857
    %v860 = vpack.c.bf16 %v858, %v858
    %v863 = vunpack.c.l.b16 %v859
    %v864 = vunpack.c.l.b16 %v860
    %v865 = vrot.slane %v863, 1
    %v866 = vsel %vm613, %v864, %v865
    %v867 = vpack.c.b16 %v866, %v866
    %868 = vrot.lane.b32.xlu0 %v867, 32
    %v869 = vpop.permute.xlu0 %868
    %v871 = vsel %vm329, %v869, 0
    %873 = vmatprep.subr.bf16.mxu0 0
    %874 = vmatpush1.bf16.msra.mxu0 %v626
    %875 = vmatprep.subr.bf16.mxu0 0
    %876 = vmatpush1.bf16.msra.mxu0 %v627
    %877 = vmatprep.subr.bf16.mxu0 0
    %878 = vmatpush1.bf16.msra.mxu0 0
    %879 = vmatprep.subr.bf16.mxu0 0
    %880 = vmatpush1.bf16.msra.mxu0 0
    %881 = vmatprep.subr.bf16.mxu0 0
    %882 = vmatpush1.bf16.msra.mxu0 0
    %883 = vmatprep.subr.bf16.mxu0 0
    %884 = vmatpush1.bf16.msra.mxu0 0
    %885 = vmatprep.subr.bf16.mxu0 0
    %886 = vmatpush1.bf16.msra.mxu0 0
    %887 = vmatprep.subr.bf16.mxu0 0
    %888 = vmatpush1.bf16.msra.mxu0 0
    %889 = vmatprep.subr.bf16.mxu0 0
    %890 = vmatpush1.bf16.msra.mxu0 0
    %891 = vmatprep.subr.bf16.mxu0 0
    %892 = vmatpush1.bf16.msra.mxu0 0
    %893 = vmatprep.subr.bf16.mxu0 0
    %894 = vmatpush1.bf16.msra.mxu0 0
    %895 = vmatprep.subr.bf16.mxu0 0
    %896 = vmatpush1.bf16.msra.mxu0 0
    %897 = vmatprep.subr.bf16.mxu0 0
    %898 = vmatpush1.bf16.msra.mxu0 0
    %899 = vmatprep.subr.bf16.mxu0 0
    %900 = vmatpush1.bf16.msra.mxu0 0
    %901 = vmatprep.subr.bf16.mxu0 0
    %902 = vmatpush1.bf16.msra.mxu0 0
    %903 = vmatprep.subr.bf16.mxu0 0
    %904 = vmatpush1.bf16.msra.mxu0 0
    %905 = vmatprep.mubr.bf16.mxu0 0
    %906 = vmatmul.mubr.bf16.gmra.mrb[0].mxu0 %v871
    %v907 = vpop.f32.mrb[0].mxu0
    %v908 = vadd.f32 %v607, %v907
    %v909 = vpop.f32.mrb[0].mxu0
    %v910 = vpop.f32.mrb[0].mxu0
    %v911 = vpop.f32.mrb[0].mxu0
    %912 = vdwg.mxu0
    %v913 = vadd.f32 %v908, %v800
    %v914 = vmul.f32 %v913, %v558
    %v915 = vtanh.pop %v914
    %v916 = vmul.f32 %v915, %v558
    %v917 = vadd.f32 %v916, %v559
    %v918 = vmul.f32 %v917, %v687
    %920 = vrot.lane.b32.xlu0 %v917, 64
    %v921 = vpop.permute.xlu0 %920
    %v923 = vmul.f32 %v917, %v921
    %925 = vrot.lane.b32.xlu0 %v923, 32
    %v926 = vpop.permute.xlu0 %925
    %v928 = vadd.f32 %v918, %v926
    %v929 = vtanh.pop %v928
    %931 = vrot.lane.b32.xlu0 %v929, 64
    %v932 = vpop.permute.xlu0 %931
    %v934 = vmul.f32 %v917, %v932
    %935 = vmatprep.subr.bf16.mxu0 0
    %936 = vmatpush1.bf16.msra.mxu0 %v702
    %937 = vmatprep.subr.bf16.mxu0 0
    %938 = vmatpush1.bf16.msra.mxu0 %v703
    %939 = vmatprep.subr.bf16.mxu0 0
    %940 = vmatpush1.bf16.msra.mxu0 0
    %941 = vmatprep.subr.bf16.mxu0 0
    %942 = vmatpush1.bf16.msra.mxu0 0
    %943 = vmatprep.subr.bf16.mxu0 0
    %944 = vmatpush1.bf16.msra.mxu0 0
    %945 = vmatprep.subr.bf16.mxu0 0
    %946 = vmatpush1.bf16.msra.mxu0 0
    %947 = vmatprep.subr.bf16.mxu0 0
    %948 = vmatpush1.bf16.msra.mxu0 0
    %949 = vmatprep.subr.bf16.mxu0 0
    %950 = vmatpush1.bf16.msra.mxu0 0
    %951 = vmatprep.subr.bf16.mxu0 0
    %952 = vmatpush1.bf16.msra.mxu0 0
    %953 = vmatprep.subr.bf16.mxu0 0
    %954 = vmatpush1.bf16.msra.mxu0 0
    %955 = vmatprep.subr.bf16.mxu0 0
    %956 = vmatpush1.bf16.msra.mxu0 0
    %957 = vmatprep.subr.bf16.mxu0 0
    %958 = vmatpush1.bf16.msra.mxu0 0
    %959 = vmatprep.subr.bf16.mxu0 0
    %960 = vmatpush1.bf16.msra.mxu0 0
    %961 = vmatprep.subr.bf16.mxu0 0
    %962 = vmatpush1.bf16.msra.mxu0 0
    %963 = vmatprep.subr.bf16.mxu0 0
    %964 = vmatpush1.bf16.msra.mxu0 0
    %965 = vmatprep.subr.bf16.mxu0 0
    %966 = vmatpush1.bf16.msra.mxu0 0
    %967 = vmatprep.mubr.bf16.mxu0 0
    %968 = vmatmul.mubr.bf16.gmra.mrb[0].mxu0 %v871
    %v969 = vpop.f32.mrb[0].mxu0
    %v970 = vadd.f32 0.0, %v969
    %v971 = vpop.f32.mrb[0].mxu0
    %v972 = vpop.f32.mrb[0].mxu0
    %v973 = vpop.f32.mrb[0].mxu0
    %974 = vdwg.mxu0
    %v975 = vpack.c.bf16 %v934, %v934
    %977 = vrot.lane.b32.xlu0 %v975, 32
    %v978 = vpop.permute.xlu0 %977
    %v980 = vsel %vm329, %v978, 0
    %982 = vmatprep.subr.bf16.mxu0 0
    %983 = vmatpush1.bf16.msra.mxu0 %v758
    %984 = vmatprep.subr.bf16.mxu0 0
    %985 = vmatpush1.bf16.msra.mxu0 %v759
    %986 = vmatprep.subr.bf16.mxu0 0
    %987 = vmatpush1.bf16.msra.mxu0 0
    %988 = vmatprep.subr.bf16.mxu0 0
    %989 = vmatpush1.bf16.msra.mxu0 0
    %990 = vmatprep.subr.bf16.mxu0 0
    %991 = vmatpush1.bf16.msra.mxu0 0
    %992 = vmatprep.subr.bf16.mxu0 0
    %993 = vmatpush1.bf16.msra.mxu0 0
    %994 = vmatprep.subr.bf16.mxu0 0
    %995 = vmatpush1.bf16.msra.mxu0 0
    %996 = vmatprep.subr.bf16.mxu0 0
    %997 = vmatpush1.bf16.msra.mxu0 0
    %998 = vmatprep.subr.bf16.mxu0 0
    %999 = vmatpush1.bf16.msra.mxu0 0
    %1000 = vmatprep.subr.bf16.mxu0 0
    %1001 = vmatpush1.bf16.msra.mxu0 0
    %1002 = vmatprep.subr.bf16.mxu0 0
    %1003 = vmatpush1.bf16.msra.mxu0 0
    %1004 = vmatprep.subr.bf16.mxu0 0
    %1005 = vmatpush1.bf16.msra.mxu0 0
    %1006 = vmatprep.subr.bf16.mxu0 0
    %1007 = vmatpush1.bf16.msra.mxu0 0
    %1008 = vmatprep.subr.bf16.mxu0 0
    %1009 = vmatpush1.bf16.msra.mxu0 0
    %1010 = vmatprep.subr.bf16.mxu0 0
    %1011 = vmatpush1.bf16.msra.mxu0 0
    %1012 = vmatprep.subr.bf16.mxu0 0
    %1013 = vmatpush1.bf16.msra.mxu0 0
    %1014 = vmatprep.mubr.bf16.mxu0 0
    %1015 = vmatmul.mubr.bf16.gmra.mrb[0].mxu0 %v980
    %v1016 = vpop.f32.mrb[0].mxu0
    %v1017 = vadd.f32 0.0, %v1016
    %v1018 = vpop.f32.mrb[0].mxu0
    %v1019 = vpop.f32.mrb[0].mxu0
    %v1020 = vpop.f32.mrb[0].mxu0
    %1021 = vdwg.mxu0
    %v1023 = vrot.slane %v970, 6
    %v1024 = vrot.slane %v970, 7
    %v1027 = vadd.f32 %v535, %v1023
    %v1028 = vadd.f32 %v538, %v1024
    %v1029 = vmul.f32 %v1027, %v558
    %v1030 = vmul.f32 %v1028, %v558
    %v1031 = vtanh.pop %v1029
    %v1032 = vtanh.pop %v1030
    %v1033 = vmul.f32 %v1031, %v558
    %v1034 = vmul.f32 %v1032, %v558
    %v1035 = vadd.f32 %v1033, %v559
    %v1036 = vadd.f32 %v1034, %v559
    %v1039 = vrot.slane %v845, 7
    %v1040 = vrot.slane %v846, 7
    %v1043 = vmul.f32 %v1035, %v1039
    %v1044 = vmul.f32 %v1036, %v1040
    %1047 = vrot.lane.b32.xlu0 %v1035, 64
    %v1048 = vpop.permute.xlu0 %1047
    %1049 = vrot.lane.b32.xlu0 %v1036, 64
    %v1050 = vpop.permute.xlu0 %1049
    %v1053 = vmul.f32 %v1035, %v1048
    %v1054 = vmul.f32 %v1036, %v1050
    %1057 = vrot.lane.b32.xlu0 %v1053, 32
    %v1058 = vpop.permute.xlu0 %1057
    %1059 = vrot.lane.b32.xlu0 %v1054, 32
    %v1060 = vpop.permute.xlu0 %1059
    %v1063 = vadd.f32 %v1043, %v1058
    %v1064 = vadd.f32 %v1044, %v1060
    %v1065 = vtanh.pop %v1063
    %v1066 = vtanh.pop %v1064
    %1069 = vrot.lane.b32.xlu0 %v1065, 64
    %v1070 = vpop.permute.xlu0 %1069
    %1071 = vrot.lane.b32.xlu0 %v1066, 64
    %v1072 = vpop.permute.xlu0 %1071
    %v1075 = vmul.f32 %v1035, %v1070
    %v1076 = vmul.f32 %v1036, %v1072
    %v1077 = vpack.c.bf16 %v1075, %v1075
    %v1078 = vpack.c.bf16 %v1076, %v1076
    %v1081 = vunpack.c.l.b16 %v1077
    %v1082 = vunpack.c.l.b16 %v1078
    %v1083 = vrot.slane %v1081, 2
    %v1084 = vrot.slane %v1082, 1
    %v1085 = vsel %vm613, %v1084, %v1083
    %v1086 = vpack.c.b16 %v1085, %v1085
    %1087 = vrot.lane.b32.xlu0 %v1086, 32
    %v1088 = vpop.permute.xlu0 %1087
    %v1090 = vsel %vm329, %v1088, 0
    %1092 = vmatprep.subr.bf16.mxu0 0
    %1093 = vmatpush1.bf16.msra.mxu0 %v626
    %1094 = vmatprep.subr.bf16.mxu0 0
    %1095 = vmatpush1.bf16.msra.mxu0 %v627
    %1096 = vmatprep.subr.bf16.mxu0 0
    %1097 = vmatpush1.bf16.msra.mxu0 0
    %1098 = vmatprep.subr.bf16.mxu0 0
    %1099 = vmatpush1.bf16.msra.mxu0 0
    %1100 = vmatprep.subr.bf16.mxu0 0
    %1101 = vmatpush1.bf16.msra.mxu0 0
    %1102 = vmatprep.subr.bf16.mxu0 0
    %1103 = vmatpush1.bf16.msra.mxu0 0
    %1104 = vmatprep.subr.bf16.mxu0 0
    %1105 = vmatpush1.bf16.msra.mxu0 0
    %1106 = vmatprep.subr.bf16.mxu0 0
    %1107 = vmatpush1.bf16.msra.mxu0 0
    %1108 = vmatprep.subr.bf16.mxu0 0
    %1109 = vmatpush1.bf16.msra.mxu0 0
    %1110 = vmatprep.subr.bf16.mxu0 0
    %1111 = vmatpush1.bf16.msra.mxu0 0
    %1112 = vmatprep.subr.bf16.mxu0 0
    %1113 = vmatpush1.bf16.msra.mxu0 0
    %1114 = vmatprep.subr.bf16.mxu0 0
    %1115 = vmatpush1.bf16.msra.mxu0 0
    %1116 = vmatprep.subr.bf16.mxu0 0
    %1117 = vmatpush1.bf16.msra.mxu0 0
    %1118 = vmatprep.subr.bf16.mxu0 0
    %1119 = vmatpush1.bf16.msra.mxu0 0
    %1120 = vmatprep.subr.bf16.mxu0 0
    %1121 = vmatpush1.bf16.msra.mxu0 0
    %1122 = vmatprep.subr.bf16.mxu0 0
    %1123 = vmatpush1.bf16.msra.mxu0 0
    %1124 = vmatprep.mubr.bf16.mxu0 0
    %1125 = vmatmul.mubr.bf16.gmra.mrb[0].mxu0 %v1090
    %v1126 = vpop.f32.mrb[0].mxu0
    %v1127 = vadd.f32 %v607, %v1126
    %v1128 = vpop.f32.mrb[0].mxu0
    %v1129 = vpop.f32.mrb[0].mxu0
    %v1130 = vpop.f32.mrb[0].mxu0
    %1131 = vdwg.mxu0
    %v1132 = vadd.f32 %v1127, %v1017
    %v1133 = vmul.f32 %v1132, %v558
    %v1134 = vtanh.pop %v1133
    %v1135 = vmul.f32 %v1134, %v558
    %v1136 = vadd.f32 %v1135, %v559
    %v1137 = vmul.f32 %v1136, %v928
    %1139 = vrot.lane.b32.xlu0 %v1136, 64
    %v1140 = vpop.permute.xlu0 %1139
    %v1142 = vmul.f32 %v1136, %v1140
    %1144 = vrot.lane.b32.xlu0 %v1142, 32
    %v1145 = vpop.permute.xlu0 %1144
    %v1147 = vadd.f32 %v1137, %v1145
    %v1148 = vtanh.pop %v1147
    %1150 = vrot.lane.b32.xlu0 %v1148, 64
    %v1151 = vpop.permute.xlu0 %1150
    %v1153 = vmul.f32 %v1136, %v1151
    %1154 = vmatprep.subr.bf16.mxu0 0
    %1155 = vmatpush1.bf16.msra.mxu0 %v702
    %1156 = vmatprep.subr.bf16.mxu0 0
    %1157 = vmatpush1.bf16.msra.mxu0 %v703
    %1158 = vmatprep.subr.bf16.mxu0 0
    %1159 = vmatpush1.bf16.msra.mxu0 0
    %1160 = vmatprep.subr.bf16.mxu0 0
    %1161 = vmatpush1.bf16.msra.mxu0 0
    %1162 = vmatprep.subr.bf16.mxu0 0
    %1163 = vmatpush1.bf16.msra.mxu0 0
    %1164 = vmatprep.subr.bf16.mxu0 0
    %1165 = vmatpush1.bf16.msra.mxu0 0
    %1166 = vmatprep.subr.bf16.mxu0 0
    %1167 = vmatpush1.bf16.msra.mxu0 0
    %1168 = vmatprep.subr.bf16.mxu0 0
    %1169 = vmatpush1.bf16.msra.mxu0 0
    %1170 = vmatprep.subr.bf16.mxu0 0
    %1171 = vmatpush1.bf16.msra.mxu0 0
    %1172 = vmatprep.subr.bf16.mxu0 0
    %1173 = vmatpush1.bf16.msra.mxu0 0
    %1174 = vmatprep.subr.bf16.mxu0 0
    %1175 = vmatpush1.bf16.msra.mxu0 0
    %1176 = vmatprep.subr.bf16.mxu0 0
    %1177 = vmatpush1.bf16.msra.mxu0 0
    %1178 = vmatprep.subr.bf16.mxu0 0
    %1179 = vmatpush1.bf16.msra.mxu0 0
    %1180 = vmatprep.subr.bf16.mxu0 0
    %1181 = vmatpush1.bf16.msra.mxu0 0
    %1182 = vmatprep.subr.bf16.mxu0 0
    %1183 = vmatpush1.bf16.msra.mxu0 0
    %1184 = vmatprep.subr.bf16.mxu0 0
    %1185 = vmatpush1.bf16.msra.mxu0 0
    %1186 = vmatprep.mubr.bf16.mxu0 0
    %1187 = vmatmul.mubr.bf16.gmra.mrb[0].mxu0 %v1090
    %v1188 = vpop.f32.mrb[0].mxu0
    %v1189 = vadd.f32 0.0, %v1188
    %v1190 = vpop.f32.mrb[0].mxu0
    %v1191 = vpop.f32.mrb[0].mxu0
    %v1192 = vpop.f32.mrb[0].mxu0
    %1193 = vdwg.mxu0
    %v1194 = vpack.c.bf16 %v1153, %v1153
    %1196 = vrot.lane.b32.xlu0 %v1194, 32
    %v1197 = vpop.permute.xlu0 %1196
    %v1199 = vsel %vm329, %v1197, 0
    %1201 = vmatprep.subr.bf16.mxu0 0
    %1202 = vmatpush1.bf16.msra.mxu0 %v758
    %1203 = vmatprep.subr.bf16.mxu0 0
    %1204 = vmatpush1.bf16.msra.mxu0 %v759
    %1205 = vmatprep.subr.bf16.mxu0 0
    %1206 = vmatpush1.bf16.msra.mxu0 0
    %1207 = vmatprep.subr.bf16.mxu0 0
    %1208 = vmatpush1.bf16.msra.mxu0 0
    %1209 = vmatprep.subr.bf16.mxu0 0
    %1210 = vmatpush1.bf16.msra.mxu0 0
    %1211 = vmatprep.subr.bf16.mxu0 0
    %1212 = vmatpush1.bf16.msra.mxu0 0
    %1213 = vmatprep.subr.bf16.mxu0 0
    %1214 = vmatpush1.bf16.msra.mxu0 0
    %1215 = vmatprep.subr.bf16.mxu0 0
    %1216 = vmatpush1.bf16.msra.mxu0 0
    %1217 = vmatprep.subr.bf16.mxu0 0
    %1218 = vmatpush1.bf16.msra.mxu0 0
    %1219 = vmatprep.subr.bf16.mxu0 0
    %1220 = vmatpush1.bf16.msra.mxu0 0
    %1221 = vmatprep.subr.bf16.mxu0 0
    %1222 = vmatpush1.bf16.msra.mxu0 0
    %1223 = vmatprep.subr.bf16.mxu0 0
    %1224 = vmatpush1.bf16.msra.mxu0 0
    %1225 = vmatprep.subr.bf16.mxu0 0
    %1226 = vmatpush1.bf16.msra.mxu0 0
    %1227 = vmatprep.subr.bf16.mxu0 0
    %1228 = vmatpush1.bf16.msra.mxu0 0
    %1229 = vmatprep.subr.bf16.mxu0 0
    %1230 = vmatpush1.bf16.msra.mxu0 0
    %1231 = vmatprep.subr.bf16.mxu0 0
    %1232 = vmatpush1.bf16.msra.mxu0 0
    %1233 = vmatprep.mubr.bf16.mxu0 0
    %1234 = vmatmul.mubr.bf16.gmra.mrb[0].mxu0 %v1199
    %v1235 = vpop.f32.mrb[0].mxu0
    %v1236 = vadd.f32 0.0, %v1235
    %v1237 = vpop.f32.mrb[0].mxu0
    %v1238 = vpop.f32.mrb[0].mxu0
    %v1239 = vpop.f32.mrb[0].mxu0
    %1240 = vdwg.mxu0
    %v1242 = vrot.slane %v1189, 5
    %v1243 = vrot.slane %v1189, 6
    %v1246 = vadd.f32 %v535, %v1242
    %v1247 = vadd.f32 %v538, %v1243
    %v1248 = vmul.f32 %v1246, %v558
    %v1249 = vmul.f32 %v1247, %v558
    %v1250 = vtanh.pop %v1248
    %v1251 = vtanh.pop %v1249
    %v1252 = vmul.f32 %v1250, %v558
    %v1253 = vmul.f32 %v1251, %v558
    %v1254 = vadd.f32 %v1252, %v559
    %v1255 = vadd.f32 %v1253, %v559
    %v1258 = vrot.slane %v1063, 7
    %v1259 = vrot.slane %v1064, 7
    %v1262 = vmul.f32 %v1254, %v1258
    %v1263 = vmul.f32 %v1255, %v1259
    %1266 = vrot.lane.b32.xlu0 %v1254, 64
    %v1267 = vpop.permute.xlu0 %1266
    %1268 = vrot.lane.b32.xlu0 %v1255, 64
    %v1269 = vpop.permute.xlu0 %1268
    %v1272 = vmul.f32 %v1254, %v1267
    %v1273 = vmul.f32 %v1255, %v1269
    %1276 = vrot.lane.b32.xlu0 %v1272, 32
    %v1277 = vpop.permute.xlu0 %1276
    %1278 = vrot.lane.b32.xlu0 %v1273, 32
    %v1279 = vpop.permute.xlu0 %1278
    %v1282 = vadd.f32 %v1262, %v1277
    %v1283 = vadd.f32 %v1263, %v1279
    %v1284 = vtanh.pop %v1282
    %v1285 = vtanh.pop %v1283
    %1288 = vrot.lane.b32.xlu0 %v1284, 64
    %v1289 = vpop.permute.xlu0 %1288
    %1290 = vrot.lane.b32.xlu0 %v1285, 64
    %v1291 = vpop.permute.xlu0 %1290
    %v1294 = vmul.f32 %v1254, %v1289
    %v1295 = vmul.f32 %v1255, %v1291
    %v1296 = vpack.c.bf16 %v1294, %v1294
    %v1297 = vpack.c.bf16 %v1295, %v1295
    %v1300 = vunpack.c.l.b16 %v1296
    %v1301 = vunpack.c.l.b16 %v1297
    %v1302 = vrot.slane %v1300, 3
    %v1303 = vrot.slane %v1301, 2
    %v1304 = vsel %vm613, %v1303, %v1302
    %v1305 = vpack.c.b16 %v1304, %v1304
    %1306 = vrot.lane.b32.xlu0 %v1305, 32
    %v1307 = vpop.permute.xlu0 %1306
    %v1309 = vsel %vm329, %v1307, 0
    %1311 = vmatprep.subr.bf16.mxu0 0
    %1312 = vmatpush1.bf16.msra.mxu0 %v626
    %1313 = vmatprep.subr.bf16.mxu0 0
    %1314 = vmatpush1.bf16.msra.mxu0 %v627
    %1315 = vmatprep.subr.bf16.mxu0 0
    %1316 = vmatpush1.bf16.msra.mxu0 0
    %1317 = vmatprep.subr.bf16.mxu0 0
    %1318 = vmatpush1.bf16.msra.mxu0 0
    %1319 = vmatprep.subr.bf16.mxu0 0
    %1320 = vmatpush1.bf16.msra.mxu0 0
    %1321 = vmatprep.subr.bf16.mxu0 0
    %1322 = vmatpush1.bf16.msra.mxu0 0
    %1323 = vmatprep.subr.bf16.mxu0 0
    %1324 = vmatpush1.bf16.msra.mxu0 0
    %1325 = vmatprep.subr.bf16.mxu0 0
    %1326 = vmatpush1.bf16.msra.mxu0 0
    %1327 = vmatprep.subr.bf16.mxu0 0
    %1328 = vmatpush1.bf16.msra.mxu0 0
    %1329 = vmatprep.subr.bf16.mxu0 0
    %1330 = vmatpush1.bf16.msra.mxu0 0
    %1331 = vmatprep.subr.bf16.mxu0 0
    %1332 = vmatpush1.bf16.msra.mxu0 0
    %1333 = vmatprep.subr.bf16.mxu0 0
    %1334 = vmatpush1.bf16.msra.mxu0 0
    %1335 = vmatprep.subr.bf16.mxu0 0
    %1336 = vmatpush1.bf16.msra.mxu0 0
    %1337 = vmatprep.subr.bf16.mxu0 0
    %1338 = vmatpush1.bf16.msra.mxu0 0
    %1339 = vmatprep.subr.bf16.mxu0 0
    %1340 = vmatpush1.bf16.msra.mxu0 0
    %1341 = vmatprep.subr.bf16.mxu0 0
    %1342 = vmatpush1.bf16.msra.mxu0 0
    %1343 = vmatprep.mubr.bf16.mxu0 0
    %1344 = vmatmul.mubr.bf16.gmra.mrb[0].mxu0 %v1309
    %v1345 = vpop.f32.mrb[0].mxu0
    %v1346 = vadd.f32 %v607, %v1345
    %v1347 = vpop.f32.mrb[0].mxu0
    %v1348 = vpop.f32.mrb[0].mxu0
    %v1349 = vpop.f32.mrb[0].mxu0
    %1350 = vdwg.mxu0
    %v1351 = vadd.f32 %v1346, %v1236
    %v1352 = vmul.f32 %v1351, %v558
    %v1353 = vtanh.pop %v1352
    %v1354 = vmul.f32 %v1353, %v558
    %v1355 = vadd.f32 %v1354, %v559
    %v1356 = vmul.f32 %v1355, %v1147
    %1358 = vrot.lane.b32.xlu0 %v1355, 64
    %v1359 = vpop.permute.xlu0 %1358
    %v1361 = vmul.f32 %v1355, %v1359
    %1363 = vrot.lane.b32.xlu0 %v1361, 32
    %v1364 = vpop.permute.xlu0 %1363
    %v1366 = vadd.f32 %v1356, %v1364
    %v1367 = vtanh.pop %v1366
    %1369 = vrot.lane.b32.xlu0 %v1367, 64
    %v1370 = vpop.permute.xlu0 %1369
    %v1372 = vmul.f32 %v1355, %v1370
    %1373 = vmatprep.subr.bf16.mxu0 0
    %1374 = vmatpush1.bf16.msra.mxu0 %v702
    %1375 = vmatprep.subr.bf16.mxu0 0
    %1376 = vmatpush1.bf16.msra.mxu0 %v703
    %1377 = vmatprep.subr.bf16.mxu0 0
    %1378 = vmatpush1.bf16.msra.mxu0 0
    %1379 = vmatprep.subr.bf16.mxu0 0
    %1380 = vmatpush1.bf16.msra.mxu0 0
    %1381 = vmatprep.subr.bf16.mxu0 0
    %1382 = vmatpush1.bf16.msra.mxu0 0
    %1383 = vmatprep.subr.bf16.mxu0 0
    %1384 = vmatpush1.bf16.msra.mxu0 0
    %1385 = vmatprep.subr.bf16.mxu0 0
    %1386 = vmatpush1.bf16.msra.mxu0 0
    %1387 = vmatprep.subr.bf16.mxu0 0
    %1388 = vmatpush1.bf16.msra.mxu0 0
    %1389 = vmatprep.subr.bf16.mxu0 0
    %1390 = vmatpush1.bf16.msra.mxu0 0
    %1391 = vmatprep.subr.bf16.mxu0 0
    %1392 = vmatpush1.bf16.msra.mxu0 0
    %1393 = vmatprep.subr.bf16.mxu0 0
    %1394 = vmatpush1.bf16.msra.mxu0 0
    %1395 = vmatprep.subr.bf16.mxu0 0
    %1396 = vmatpush1.bf16.msra.mxu0 0
    %1397 = vmatprep.subr.bf16.mxu0 0
    %1398 = vmatpush1.bf16.msra.mxu0 0
    %1399 = vmatprep.subr.bf16.mxu0 0
    %1400 = vmatpush1.bf16.msra.mxu0 0
    %1401 = vmatprep.subr.bf16.mxu0 0
    %1402 = vmatpush1.bf16.msra.mxu0 0
    %1403 = vmatprep.subr.bf16.mxu0 0
    %1404 = vmatpush1.bf16.msra.mxu0 0
    %1405 = vmatprep.mubr.bf16.mxu0 0
    %1406 = vmatmul.mubr.bf16.gmra.mrb[0].mxu0 %v1309
    %v1407 = vpop.f32.mrb[0].mxu0
    %v1408 = vadd.f32 0.0, %v1407
    %v1409 = vpop.f32.mrb[0].mxu0
    %v1410 = vpop.f32.mrb[0].mxu0
    %v1411 = vpop.f32.mrb[0].mxu0
    %1412 = vdwg.mxu0
    %v1413 = vpack.c.bf16 %v1372, %v1372
    %1415 = vrot.lane.b32.xlu0 %v1413, 32
    %v1416 = vpop.permute.xlu0 %1415
    %v1418 = vsel %vm329, %v1416, 0
    %1420 = vmatprep.subr.bf16.mxu0 0
    %1421 = vmatpush1.bf16.msra.mxu0 %v758
    %1422 = vmatprep.subr.bf16.mxu0 0
    %1423 = vmatpush1.bf16.msra.mxu0 %v759
    %1424 = vmatprep.subr.bf16.mxu0 0
    %1425 = vmatpush1.bf16.msra.mxu0 0
    %1426 = vmatprep.subr.bf16.mxu0 0
    %1427 = vmatpush1.bf16.msra.mxu0 0
    %1428 = vmatprep.subr.bf16.mxu0 0
    %1429 = vmatpush1.bf16.msra.mxu0 0
    %1430 = vmatprep.subr.bf16.mxu0 0
    %1431 = vmatpush1.bf16.msra.mxu0 0
    %1432 = vmatprep.subr.bf16.mxu0 0
    %1433 = vmatpush1.bf16.msra.mxu0 0
    %1434 = vmatprep.subr.bf16.mxu0 0
    %1435 = vmatpush1.bf16.msra.mxu0 0
    %1436 = vmatprep.subr.bf16.mxu0 0
    %1437 = vmatpush1.bf16.msra.mxu0 0
    %1438 = vmatprep.subr.bf16.mxu0 0
    %1439 = vmatpush1.bf16.msra.mxu0 0
    %1440 = vmatprep.subr.bf16.mxu0 0
    %1441 = vmatpush1.bf16.msra.mxu0 0
    %1442 = vmatprep.subr.bf16.mxu0 0
    %1443 = vmatpush1.bf16.msra.mxu0 0
    %1444 = vmatprep.subr.bf16.mxu0 0
    %1445 = vmatpush1.bf16.msra.mxu0 0
    %1446 = vmatprep.subr.bf16.mxu0 0
    %1447 = vmatpush1.bf16.msra.mxu0 0
    %1448 = vmatprep.subr.bf16.mxu0 0
    %1449 = vmatpush1.bf16.msra.mxu0 0
    %1450 = vmatprep.subr.bf16.mxu0 0
    %1451 = vmatpush1.bf16.msra.mxu0 0
    %1452 = vmatprep.mubr.bf16.mxu0 0
    %1453 = vmatmul.mubr.bf16.gmra.mrb[0].mxu0 %v1418
    %v1454 = vpop.f32.mrb[0].mxu0
    %v1455 = vadd.f32 0.0, %v1454
    %v1456 = vpop.f32.mrb[0].mxu0
    %v1457 = vpop.f32.mrb[0].mxu0
    %v1458 = vpop.f32.mrb[0].mxu0
    %1459 = vdwg.mxu0
    %v1461 = vrot.slane %v1408, 4
    %v1462 = vrot.slane %v1408, 5
    %v1465 = vadd.f32 %v535, %v1461
    %v1466 = vadd.f32 %v538, %v1462
    %v1467 = vmul.f32 %v1465, %v558
    %v1468 = vmul.f32 %v1466, %v558
    %v1469 = vtanh.pop %v1467
    %v1470 = vtanh.pop %v1468
    %v1471 = vmul.f32 %v1469, %v558
    %v1472 = vmul.f32 %v1470, %v558
    %v1473 = vadd.f32 %v1471, %v559
    %v1474 = vadd.f32 %v1472, %v559
    %v1477 = vrot.slane %v1282, 7
    %v1478 = vrot.slane %v1283, 7
    %v1481 = vmul.f32 %v1473, %v1477
    %v1482 = vmul.f32 %v1474, %v1478
    %1485 = vrot.lane.b32.xlu0 %v1473, 64
    %v1486 = vpop.permute.xlu0 %1485
    %1487 = vrot.lane.b32.xlu0 %v1474, 64
    %v1488 = vpop.permute.xlu0 %1487
    %v1491 = vmul.f32 %v1473, %v1486
    %v1492 = vmul.f32 %v1474, %v1488
    %1495 = vrot.lane.b32.xlu0 %v1491, 32
    %v1496 = vpop.permute.xlu0 %1495
    %1497 = vrot.lane.b32.xlu0 %v1492, 32
    %v1498 = vpop.permute.xlu0 %1497
    %v1501 = vadd.f32 %v1481, %v1496
    %v1502 = vadd.f32 %v1482, %v1498
    %v1503 = vtanh.pop %v1501
    %v1504 = vtanh.pop %v1502
    %1507 = vrot.lane.b32.xlu0 %v1503, 64
    %v1508 = vpop.permute.xlu0 %1507
    %1509 = vrot.lane.b32.xlu0 %v1504, 64
    %v1510 = vpop.permute.xlu0 %1509
    %v1513 = vmul.f32 %v1473, %v1508
    %v1514 = vmul.f32 %v1474, %v1510
    %v1515 = vpack.c.bf16 %v1513, %v1513
    %v1516 = vpack.c.bf16 %v1514, %v1514
    %v1519 = vunpack.c.l.b16 %v1515
    %v1520 = vunpack.c.l.b16 %v1516
    %v1521 = vrot.slane %v1519, 4
    %v1522 = vrot.slane %v1520, 3
    %v1523 = vsel %vm613, %v1522, %v1521
    %v1524 = vpack.c.b16 %v1523, %v1523
    %1525 = vrot.lane.b32.xlu0 %v1524, 32
    %v1526 = vpop.permute.xlu0 %1525
    %v1528 = vsel %vm329, %v1526, 0
    %1530 = vmatprep.subr.bf16.mxu0 0
    %1531 = vmatpush1.bf16.msra.mxu0 %v626
    %1532 = vmatprep.subr.bf16.mxu0 0
    %1533 = vmatpush1.bf16.msra.mxu0 %v627
    %1534 = vmatprep.subr.bf16.mxu0 0
    %1535 = vmatpush1.bf16.msra.mxu0 0
    %1536 = vmatprep.subr.bf16.mxu0 0
    %1537 = vmatpush1.bf16.msra.mxu0 0
    %1538 = vmatprep.subr.bf16.mxu0 0
    %1539 = vmatpush1.bf16.msra.mxu0 0
    %1540 = vmatprep.subr.bf16.mxu0 0
    %1541 = vmatpush1.bf16.msra.mxu0 0
    %1542 = vmatprep.subr.bf16.mxu0 0
    %1543 = vmatpush1.bf16.msra.mxu0 0
    %1544 = vmatprep.subr.bf16.mxu0 0
    %1545 = vmatpush1.bf16.msra.mxu0 0
    %1546 = vmatprep.subr.bf16.mxu0 0
    %1547 = vmatpush1.bf16.msra.mxu0 0
    %1548 = vmatprep.subr.bf16.mxu0 0
    %1549 = vmatpush1.bf16.msra.mxu0 0
    %1550 = vmatprep.subr.bf16.mxu0 0
    %1551 = vmatpush1.bf16.msra.mxu0 0
    %1552 = vmatprep.subr.bf16.mxu0 0
    %1553 = vmatpush1.bf16.msra.mxu0 0
    %1554 = vmatprep.subr.bf16.mxu0 0
    %1555 = vmatpush1.bf16.msra.mxu0 0
    %1556 = vmatprep.subr.bf16.mxu0 0
    %1557 = vmatpush1.bf16.msra.mxu0 0
    %1558 = vmatprep.subr.bf16.mxu0 0
    %1559 = vmatpush1.bf16.msra.mxu0 0
    %1560 = vmatprep.subr.bf16.mxu0 0
    %1561 = vmatpush1.bf16.msra.mxu0 0
    %1562 = vmatprep.mubr.bf16.mxu0 0
    %1563 = vmatmul.mubr.bf16.gmra.mrb[0].mxu0 %v1528
    %v1564 = vpop.f32.mrb[0].mxu0
    %v1565 = vadd.f32 %v607, %v1564
    %v1566 = vpop.f32.mrb[0].mxu0
    %v1567 = vpop.f32.mrb[0].mxu0
    %v1568 = vpop.f32.mrb[0].mxu0
    %1569 = vdwg.mxu0
    %v1570 = vadd.f32 %v1565, %v1455
    %v1571 = vmul.f32 %v1570, %v558
    %v1572 = vtanh.pop %v1571
    %v1573 = vmul.f32 %v1572, %v558
    %v1574 = vadd.f32 %v1573, %v559
    %v1575 = vmul.f32 %v1574, %v1366
    %1577 = vrot.lane.b32.xlu0 %v1574, 64
    %v1578 = vpop.permute.xlu0 %1577
    %v1580 = vmul.f32 %v1574, %v1578
    %1582 = vrot.lane.b32.xlu0 %v1580, 32
    %v1583 = vpop.permute.xlu0 %1582
    %v1585 = vadd.f32 %v1575, %v1583
    %v1586 = vtanh.pop %v1585
    %1588 = vrot.lane.b32.xlu0 %v1586, 64
    %v1589 = vpop.permute.xlu0 %1588
    %v1591 = vmul.f32 %v1574, %v1589
    %1592 = vmatprep.subr.bf16.mxu0 0
    %1593 = vmatpush1.bf16.msra.mxu0 %v702
    %1594 = vmatprep.subr.bf16.mxu0 0
    %1595 = vmatpush1.bf16.msra.mxu0 %v703
    %1596 = vmatprep.subr.bf16.mxu0 0
    %1597 = vmatpush1.bf16.msra.mxu0 0
    %1598 = vmatprep.subr.bf16.mxu0 0
    %1599 = vmatpush1.bf16.msra.mxu0 0
    %1600 = vmatprep.subr.bf16.mxu0 0
    %1601 = vmatpush1.bf16.msra.mxu0 0
    %1602 = vmatprep.subr.bf16.mxu0 0
    %1603 = vmatpush1.bf16.msra.mxu0 0
    %1604 = vmatprep.subr.bf16.mxu0 0
    %1605 = vmatpush1.bf16.msra.mxu0 0
    %1606 = vmatprep.subr.bf16.mxu0 0
    %1607 = vmatpush1.bf16.msra.mxu0 0
    %1608 = vmatprep.subr.bf16.mxu0 0
    %1609 = vmatpush1.bf16.msra.mxu0 0
    %1610 = vmatprep.subr.bf16.mxu0 0
    %1611 = vmatpush1.bf16.msra.mxu0 0
    %1612 = vmatprep.subr.bf16.mxu0 0
    %1613 = vmatpush1.bf16.msra.mxu0 0
    %1614 = vmatprep.subr.bf16.mxu0 0
    %1615 = vmatpush1.bf16.msra.mxu0 0
    %1616 = vmatprep.subr.bf16.mxu0 0
    %1617 = vmatpush1.bf16.msra.mxu0 0
    %1618 = vmatprep.subr.bf16.mxu0 0
    %1619 = vmatpush1.bf16.msra.mxu0 0
    %1620 = vmatprep.subr.bf16.mxu0 0
    %1621 = vmatpush1.bf16.msra.mxu0 0
    %1622 = vmatprep.subr.bf16.mxu0 0
    %1623 = vmatpush1.bf16.msra.mxu0 0
    %1624 = vmatprep.mubr.bf16.mxu0 0
    %1625 = vmatmul.mubr.bf16.gmra.mrb[0].mxu0 %v1528
    %v1626 = vpop.f32.mrb[0].mxu0
    %v1627 = vadd.f32 0.0, %v1626
    %v1628 = vpop.f32.mrb[0].mxu0
    %v1629 = vpop.f32.mrb[0].mxu0
    %v1630 = vpop.f32.mrb[0].mxu0
    %1631 = vdwg.mxu0
    %v1632 = vpack.c.bf16 %v1591, %v1591
    %1634 = vrot.lane.b32.xlu0 %v1632, 32
    %v1635 = vpop.permute.xlu0 %1634
    %v1637 = vsel %vm329, %v1635, 0
    %1639 = vmatprep.subr.bf16.mxu0 0
    %1640 = vmatpush1.bf16.msra.mxu0 %v758
    %1641 = vmatprep.subr.bf16.mxu0 0
    %1642 = vmatpush1.bf16.msra.mxu0 %v759
    %1643 = vmatprep.subr.bf16.mxu0 0
    %1644 = vmatpush1.bf16.msra.mxu0 0
    %1645 = vmatprep.subr.bf16.mxu0 0
    %1646 = vmatpush1.bf16.msra.mxu0 0
    %1647 = vmatprep.subr.bf16.mxu0 0
    %1648 = vmatpush1.bf16.msra.mxu0 0
    %1649 = vmatprep.subr.bf16.mxu0 0
    %1650 = vmatpush1.bf16.msra.mxu0 0
    %1651 = vmatprep.subr.bf16.mxu0 0
    %1652 = vmatpush1.bf16.msra.mxu0 0
    %1653 = vmatprep.subr.bf16.mxu0 0
    %1654 = vmatpush1.bf16.msra.mxu0 0
    %1655 = vmatprep.subr.bf16.mxu0 0
    %1656 = vmatpush1.bf16.msra.mxu0 0
    %1657 = vmatprep.subr.bf16.mxu0 0
    %1658 = vmatpush1.bf16.msra.mxu0 0
    %1659 = vmatprep.subr.bf16.mxu0 0
    %1660 = vmatpush1.bf16.msra.mxu0 0
    %1661 = vmatprep.subr.bf16.mxu0 0
    %1662 = vmatpush1.bf16.msra.mxu0 0
    %1663 = vmatprep.subr.bf16.mxu0 0
    %1664 = vmatpush1.bf16.msra.mxu0 0
    %1665 = vmatprep.subr.bf16.mxu0 0
    %1666 = vmatpush1.bf16.msra.mxu0 0
    %1667 = vmatprep.subr.bf16.mxu0 0
    %1668 = vmatpush1.bf16.msra.mxu0 0
    %1669 = vmatprep.subr.bf16.mxu0 0
    %1670 = vmatpush1.bf16.msra.mxu0 0
    %1671 = vmatprep.mubr.bf16.mxu0 0
    %1672 = vmatmul.mubr.bf16.gmra.mrb[0].mxu0 %v1637
    %v1673 = vpop.f32.mrb[0].mxu0
    %v1674 = vadd.f32 0.0, %v1673
    %v1675 = vpop.f32.mrb[0].mxu0
    %v1676 = vpop.f32.mrb[0].mxu0
    %v1677 = vpop.f32.mrb[0].mxu0
    %1678 = vdwg.mxu0
    %v1680 = vrot.slane %v1627, 3
    %v1681 = vrot.slane %v1627, 4
    %v1684 = vadd.f32 %v535, %v1680
    %v1685 = vadd.f32 %v538, %v1681
    %v1686 = vmul.f32 %v1684, %v558
    %v1687 = vmul.f32 %v1685, %v558
    %v1688 = vtanh.pop %v1686
    %v1689 = vtanh.pop %v1687
    %v1690 = vmul.f32 %v1688, %v558
    %v1691 = vmul.f32 %v1689, %v558
    %v1692 = vadd.f32 %v1690, %v559
    %v1693 = vadd.f32 %v1691, %v559
    %v1696 = vrot.slane %v1501, 7
    %v1697 = vrot.slane %v1502, 7
    %v1700 = vmul.f32 %v1692, %v1696
    %v1701 = vmul.f32 %v1693, %v1697
    %1704 = vrot.lane.b32.xlu0 %v1692, 64
    %v1705 = vpop.permute.xlu0 %1704
    %1706 = vrot.lane.b32.xlu0 %v1693, 64
    %v1707 = vpop.permute.xlu0 %1706
    %v1710 = vmul.f32 %v1692, %v1705
    %v1711 = vmul.f32 %v1693, %v1707
    %1714 = vrot.lane.b32.xlu0 %v1710, 32
    %v1715 = vpop.permute.xlu0 %1714
    %1716 = vrot.lane.b32.xlu0 %v1711, 32
    %v1717 = vpop.permute.xlu0 %1716
    %v1720 = vadd.f32 %v1700, %v1715
    %v1721 = vadd.f32 %v1701, %v1717
    %v1722 = vtanh.pop %v1720
    %v1723 = vtanh.pop %v1721
    %1726 = vrot.lane.b32.xlu0 %v1722, 64
    %v1727 = vpop.permute.xlu0 %1726
    %1728 = vrot.lane.b32.xlu0 %v1723, 64
    %v1729 = vpop.permute.xlu0 %1728
    %v1732 = vmul.f32 %v1692, %v1727
    %v1733 = vmul.f32 %v1693, %v1729
    %v1734 = vpack.c.bf16 %v1732, %v1732
    %v1735 = vpack.c.bf16 %v1733, %v1733
    %v1738 = vunpack.c.l.b16 %v1734
    %v1739 = vunpack.c.l.b16 %v1735
    %v1740 = vrot.slane %v1738, 5
    %v1741 = vrot.slane %v1739, 4
    %v1742 = vsel %vm613, %v1741, %v1740
    %v1743 = vpack.c.b16 %v1742, %v1742
    %1744 = vrot.lane.b32.xlu0 %v1743, 32
    %v1745 = vpop.permute.xlu0 %1744
    %v1747 = vsel %vm329, %v1745, 0
    %1749 = vmatprep.subr.bf16.mxu0 0
    %1750 = vmatpush1.bf16.msra.mxu0 %v626
    %1751 = vmatprep.subr.bf16.mxu0 0
    %1752 = vmatpush1.bf16.msra.mxu0 %v627
    %1753 = vmatprep.subr.bf16.mxu0 0
    %1754 = vmatpush1.bf16.msra.mxu0 0
    %1755 = vmatprep.subr.bf16.mxu0 0
    %1756 = vmatpush1.bf16.msra.mxu0 0
    %1757 = vmatprep.subr.bf16.mxu0 0
    %1758 = vmatpush1.bf16.msra.mxu0 0
    %1759 = vmatprep.subr.bf16.mxu0 0
    %1760 = vmatpush1.bf16.msra.mxu0 0
    %1761 = vmatprep.subr.bf16.mxu0 0
    %1762 = vmatpush1.bf16.msra.mxu0 0
    %1763 = vmatprep.subr.bf16.mxu0 0
    %1764 = vmatpush1.bf16.msra.mxu0 0
    %1765 = vmatprep.subr.bf16.mxu0 0
    %1766 = vmatpush1.bf16.msra.mxu0 0
    %1767 = vmatprep.subr.bf16.mxu0 0
    %1768 = vmatpush1.bf16.msra.mxu0 0
    %1769 = vmatprep.subr.bf16.mxu0 0
    %1770 = vmatpush1.bf16.msra.mxu0 0
    %1771 = vmatprep.subr.bf16.mxu0 0
    %1772 = vmatpush1.bf16.msra.mxu0 0
    %1773 = vmatprep.subr.bf16.mxu0 0
    %1774 = vmatpush1.bf16.msra.mxu0 0
    %1775 = vmatprep.subr.bf16.mxu0 0
    %1776 = vmatpush1.bf16.msra.mxu0 0
    %1777 = vmatprep.subr.bf16.mxu0 0
    %1778 = vmatpush1.bf16.msra.mxu0 0
    %1779 = vmatprep.subr.bf16.mxu0 0
    %1780 = vmatpush1.bf16.msra.mxu0 0
    %1781 = vmatprep.mubr.bf16.mxu0 0
    %1782 = vmatmul.mubr.bf16.gmra.mrb[0].mxu0 %v1747
    %v1783 = vpop.f32.mrb[0].mxu0
    %v1784 = vadd.f32 %v607, %v1783
    %v1785 = vpop.f32.mrb[0].mxu0
    %v1786 = vpop.f32.mrb[0].mxu0
    %v1787 = vpop.f32.mrb[0].mxu0
    %1788 = vdwg.mxu0
    %v1789 = vadd.f32 %v1784, %v1674
    %v1790 = vmul.f32 %v1789, %v558
    %v1791 = vtanh.pop %v1790
    %v1792 = vmul.f32 %v1791, %v558
    %v1793 = vadd.f32 %v1792, %v559
    %v1794 = vmul.f32 %v1793, %v1585
    %1796 = vrot.lane.b32.xlu0 %v1793, 64
    %v1797 = vpop.permute.xlu0 %1796
    %v1799 = vmul.f32 %v1793, %v1797
    %1801 = vrot.lane.b32.xlu0 %v1799, 32
    %v1802 = vpop.permute.xlu0 %1801
    %v1804 = vadd.f32 %v1794, %v1802
    %v1805 = vtanh.pop %v1804
    %1807 = vrot.lane.b32.xlu0 %v1805, 64
    %v1808 = vpop.permute.xlu0 %1807
    %v1810 = vmul.f32 %v1793, %v1808
    %1811 = vmatprep.subr.bf16.mxu0 0
    %1812 = vmatpush1.bf16.msra.mxu0 %v702
    %1813 = vmatprep.subr.bf16.mxu0 0
    %1814 = vmatpush1.bf16.msra.mxu0 %v703
    %1815 = vmatprep.subr.bf16.mxu0 0
    %1816 = vmatpush1.bf16.msra.mxu0 0
    %1817 = vmatprep.subr.bf16.mxu0 0
    %1818 = vmatpush1.bf16.msra.mxu0 0
    %1819 = vmatprep.subr.bf16.mxu0 0
    %1820 = vmatpush1.bf16.msra.mxu0 0
    %1821 = vmatprep.subr.bf16.mxu0 0
    %1822 = vmatpush1.bf16.msra.mxu0 0
    %1823 = vmatprep.subr.bf16.mxu0 0
    %1824 = vmatpush1.bf16.msra.mxu0 0
    %1825 = vmatprep.subr.bf16.mxu0 0
    %1826 = vmatpush1.bf16.msra.mxu0 0
    %1827 = vmatprep.subr.bf16.mxu0 0
    %1828 = vmatpush1.bf16.msra.mxu0 0
    %1829 = vmatprep.subr.bf16.mxu0 0
    %1830 = vmatpush1.bf16.msra.mxu0 0
    %1831 = vmatprep.subr.bf16.mxu0 0
    %1832 = vmatpush1.bf16.msra.mxu0 0
    %1833 = vmatprep.subr.bf16.mxu0 0
    %1834 = vmatpush1.bf16.msra.mxu0 0
    %1835 = vmatprep.subr.bf16.mxu0 0
    %1836 = vmatpush1.bf16.msra.mxu0 0
    %1837 = vmatprep.subr.bf16.mxu0 0
    %1838 = vmatpush1.bf16.msra.mxu0 0
    %1839 = vmatprep.subr.bf16.mxu0 0
    %1840 = vmatpush1.bf16.msra.mxu0 0
    %1841 = vmatprep.subr.bf16.mxu0 0
    %1842 = vmatpush1.bf16.msra.mxu0 0
    %1843 = vmatprep.mubr.bf16.mxu0 0
    %1844 = vmatmul.mubr.bf16.gmra.mrb[0].mxu0 %v1747
    %v1845 = vpop.f32.mrb[0].mxu0
    %v1846 = vadd.f32 0.0, %v1845
    %v1847 = vpop.f32.mrb[0].mxu0
    %v1848 = vpop.f32.mrb[0].mxu0
    %v1849 = vpop.f32.mrb[0].mxu0
    %1850 = vdwg.mxu0
    %v1851 = vpack.c.bf16 %v1810, %v1810
    %1853 = vrot.lane.b32.xlu0 %v1851, 32
    %v1854 = vpop.permute.xlu0 %1853
    %v1856 = vsel %vm329, %v1854, 0
    %1858 = vmatprep.subr.bf16.mxu0 0
    %1859 = vmatpush1.bf16.msra.mxu0 %v758
    %1860 = vmatprep.subr.bf16.mxu0 0
    %1861 = vmatpush1.bf16.msra.mxu0 %v759
    %1862 = vmatprep.subr.bf16.mxu0 0
    %1863 = vmatpush1.bf16.msra.mxu0 0
    %1864 = vmatprep.subr.bf16.mxu0 0
    %1865 = vmatpush1.bf16.msra.mxu0 0
    %1866 = vmatprep.subr.bf16.mxu0 0
    %1867 = vmatpush1.bf16.msra.mxu0 0
    %1868 = vmatprep.subr.bf16.mxu0 0
    %1869 = vmatpush1.bf16.msra.mxu0 0
    %1870 = vmatprep.subr.bf16.mxu0 0
    %1871 = vmatpush1.bf16.msra.mxu0 0
    %1872 = vmatprep.subr.bf16.mxu0 0
    %1873 = vmatpush1.bf16.msra.mxu0 0
    %1874 = vmatprep.subr.bf16.mxu0 0
    %1875 = vmatpush1.bf16.msra.mxu0 0
    %1876 = vmatprep.subr.bf16.mxu0 0
    %1877 = vmatpush1.bf16.msra.mxu0 0
    %1878 = vmatprep.subr.bf16.mxu0 0
    %1879 = vmatpush1.bf16.msra.mxu0 0
    %1880 = vmatprep.subr.bf16.mxu0 0
    %1881 = vmatpush1.bf16.msra.mxu0 0
    %1882 = vmatprep.subr.bf16.mxu0 0
    %1883 = vmatpush1.bf16.msra.mxu0 0
    %1884 = vmatprep.subr.bf16.mxu0 0
    %1885 = vmatpush1.bf16.msra.mxu0 0
    %1886 = vmatprep.subr.bf16.mxu0 0
    %1887 = vmatpush1.bf16.msra.mxu0 0
    %1888 = vmatprep.subr.bf16.mxu0 0
    %1889 = vmatpush1.bf16.msra.mxu0 0
    %1890 = vmatprep.mubr.bf16.mxu0 0
    %1891 = vmatmul.mubr.bf16.gmra.mrb[0].mxu0 %v1856
    %v1892 = vpop.f32.mrb[0].mxu0
    %v1893 = vadd.f32 0.0, %v1892
    %v1894 = vpop.f32.mrb[0].mxu0
    %v1895 = vpop.f32.mrb[0].mxu0
    %v1896 = vpop.f32.mrb[0].mxu0
    %1897 = vdwg.mxu0
    %v1899 = vrot.slane %v1846, 2
    %v1900 = vrot.slane %v1846, 3
    %v1903 = vadd.f32 %v535, %v1899
    %v1904 = vadd.f32 %v538, %v1900
    %v1905 = vmul.f32 %v1903, %v558
    %v1906 = vmul.f32 %v1904, %v558
    %v1907 = vtanh.pop %v1905
    %v1908 = vtanh.pop %v1906
    %v1909 = vmul.f32 %v1907, %v558
    %v1910 = vmul.f32 %v1908, %v558
    %v1911 = vadd.f32 %v1909, %v559
    %v1912 = vadd.f32 %v1910, %v559
    %v1915 = vrot.slane %v1720, 7
    %v1916 = vrot.slane %v1721, 7
    %v1919 = vmul.f32 %v1911, %v1915
    %v1920 = vmul.f32 %v1912, %v1916
    %1923 = vrot.lane.b32.xlu0 %v1911, 64
    %v1924 = vpop.permute.xlu0 %1923
    %1925 = vrot.lane.b32.xlu0 %v1912, 64
    %v1926 = vpop.permute.xlu0 %1925
    %v1929 = vmul.f32 %v1911, %v1924
    %v1930 = vmul.f32 %v1912, %v1926
    %1933 = vrot.lane.b32.xlu0 %v1929, 32
    %v1934 = vpop.permute.xlu0 %1933
    %1935 = vrot.lane.b32.xlu0 %v1930, 32
    %v1936 = vpop.permute.xlu0 %1935
    %v1939 = vadd.f32 %v1919, %v1934
    %v1940 = vadd.f32 %v1920, %v1936
    %v1941 = vtanh.pop %v1939
    %v1942 = vtanh.pop %v1940
    %1945 = vrot.lane.b32.xlu0 %v1941, 64
    %v1946 = vpop.permute.xlu0 %1945
    %1947 = vrot.lane.b32.xlu0 %v1942, 64
    %v1948 = vpop.permute.xlu0 %1947
    %v1951 = vmul.f32 %v1911, %v1946
    %v1952 = vmul.f32 %v1912, %v1948
    %v1953 = vpack.c.bf16 %v1951, %v1951
    %v1954 = vpack.c.bf16 %v1952, %v1952
    %v1957 = vunpack.c.l.b16 %v1953
    %v1958 = vunpack.c.l.b16 %v1954
    %v1959 = vrot.slane %v1957, 6
    %v1960 = vrot.slane %v1958, 5
    %v1961 = vsel %vm613, %v1960, %v1959
    %v1962 = vpack.c.b16 %v1961, %v1961
    %1963 = vrot.lane.b32.xlu0 %v1962, 32
    %v1964 = vpop.permute.xlu0 %1963
    %v1966 = vsel %vm329, %v1964, 0
    %1968 = vmatprep.subr.bf16.mxu0 0
    %1969 = vmatpush1.bf16.msra.mxu0 %v626
    %1970 = vmatprep.subr.bf16.mxu0 0
    %1971 = vmatpush1.bf16.msra.mxu0 %v627
    %1972 = vmatprep.subr.bf16.mxu0 0
    %1973 = vmatpush1.bf16.msra.mxu0 0
    %1974 = vmatprep.subr.bf16.mxu0 0
    %1975 = vmatpush1.bf16.msra.mxu0 0
    %1976 = vmatprep.subr.bf16.mxu0 0
    %1977 = vmatpush1.bf16.msra.mxu0 0
    %1978 = vmatprep.subr.bf16.mxu0 0
    %1979 = vmatpush1.bf16.msra.mxu0 0
    %1980 = vmatprep.subr.bf16.mxu0 0
    %1981 = vmatpush1.bf16.msra.mxu0 0
    %1982 = vmatprep.subr.bf16.mxu0 0
    %1983 = vmatpush1.bf16.msra.mxu0 0
    %1984 = vmatprep.subr.bf16.mxu0 0
    %1985 = vmatpush1.bf16.msra.mxu0 0
    %1986 = vmatprep.subr.bf16.mxu0 0
    %1987 = vmatpush1.bf16.msra.mxu0 0
    %1988 = vmatprep.subr.bf16.mxu0 0
    %1989 = vmatpush1.bf16.msra.mxu0 0
    %1990 = vmatprep.subr.bf16.mxu0 0
    %1991 = vmatpush1.bf16.msra.mxu0 0
    %1992 = vmatprep.subr.bf16.mxu0 0
    %1993 = vmatpush1.bf16.msra.mxu0 0
    %1994 = vmatprep.subr.bf16.mxu0 0
    %1995 = vmatpush1.bf16.msra.mxu0 0
    %1996 = vmatprep.subr.bf16.mxu0 0
    %1997 = vmatpush1.bf16.msra.mxu0 0
    %1998 = vmatprep.subr.bf16.mxu0 0
    %1999 = vmatpush1.bf16.msra.mxu0 0
    %2000 = vmatprep.mubr.bf16.mxu0 0
    %2001 = vmatmul.mubr.bf16.gmra.mrb[0].mxu0 %v1966
    %v2002 = vpop.f32.mrb[0].mxu0
    %v2003 = vadd.f32 %v607, %v2002
    %v2004 = vpop.f32.mrb[0].mxu0
    %v2005 = vpop.f32.mrb[0].mxu0
    %v2006 = vpop.f32.mrb[0].mxu0
    %2007 = vdwg.mxu0
    %v2008 = vadd.f32 %v2003, %v1893
    %v2009 = vmul.f32 %v2008, %v558
    %v2010 = vtanh.pop %v2009
    %v2011 = vmul.f32 %v2010, %v558
    %v2012 = vadd.f32 %v2011, %v559
    %v2013 = vmul.f32 %v2012, %v1804
    %2015 = vrot.lane.b32.xlu0 %v2012, 64
    %v2016 = vpop.permute.xlu0 %2015
    %v2018 = vmul.f32 %v2012, %v2016
    %2020 = vrot.lane.b32.xlu0 %v2018, 32
    %v2021 = vpop.permute.xlu0 %2020
    %v2023 = vadd.f32 %v2013, %v2021
    %v2024 = vtanh.pop %v2023
    %2026 = vrot.lane.b32.xlu0 %v2024, 64
    %v2027 = vpop.permute.xlu0 %2026
    %v2029 = vmul.f32 %v2012, %v2027
    %2030 = vmatprep.subr.bf16.mxu0 0
    %2031 = vmatpush1.bf16.msra.mxu0 %v702
    %2032 = vmatprep.subr.bf16.mxu0 0
    %2033 = vmatpush1.bf16.msra.mxu0 %v703
    %2034 = vmatprep.subr.bf16.mxu0 0
    %2035 = vmatpush1.bf16.msra.mxu0 0
    %2036 = vmatprep.subr.bf16.mxu0 0
    %2037 = vmatpush1.bf16.msra.mxu0 0
    %2038 = vmatprep.subr.bf16.mxu0 0
    %2039 = vmatpush1.bf16.msra.mxu0 0
    %2040 = vmatprep.subr.bf16.mxu0 0
    %2041 = vmatpush1.bf16.msra.mxu0 0
    %2042 = vmatprep.subr.bf16.mxu0 0
    %2043 = vmatpush1.bf16.msra.mxu0 0
    %2044 = vmatprep.subr.bf16.mxu0 0
    %2045 = vmatpush1.bf16.msra.mxu0 0
    %2046 = vmatprep.subr.bf16.mxu0 0
    %2047 = vmatpush1.bf16.msra.mxu0 0
    %2048 = vmatprep.subr.bf16.mxu0 0
    %2049 = vmatpush1.bf16.msra.mxu0 0
    %2050 = vmatprep.subr.bf16.mxu0 0
    %2051 = vmatpush1.bf16.msra.mxu0 0
    %2052 = vmatprep.subr.bf16.mxu0 0
    %2053 = vmatpush1.bf16.msra.mxu0 0
    %2054 = vmatprep.subr.bf16.mxu0 0
    %2055 = vmatpush1.bf16.msra.mxu0 0
    %2056 = vmatprep.subr.bf16.mxu0 0
    %2057 = vmatpush1.bf16.msra.mxu0 0
    %2058 = vmatprep.subr.bf16.mxu0 0
    %2059 = vmatpush1.bf16.msra.mxu0 0
    %2060 = vmatprep.subr.bf16.mxu0 0
    %2061 = vmatpush1.bf16.msra.mxu0 0
    %2062 = vmatprep.mubr.bf16.mxu0 0
    %2063 = vmatmul.mubr.bf16.gmra.mrb[0].mxu0 %v1966
    %v2064 = vpop.f32.mrb[0].mxu0
    %v2065 = vadd.f32 0.0, %v2064
    %v2066 = vpop.f32.mrb[0].mxu0
    %v2067 = vpop.f32.mrb[0].mxu0
    %v2068 = vpop.f32.mrb[0].mxu0
    %2069 = vdwg.mxu0
    %v2070 = vpack.c.bf16 %v2029, %v2029
    %2072 = vrot.lane.b32.xlu0 %v2070, 32
    %v2073 = vpop.permute.xlu0 %2072
    %v2075 = vsel %vm329, %v2073, 0
    %2077 = vmatprep.subr.bf16.mxu0 0
    %2078 = vmatpush1.bf16.msra.mxu0 %v758
    %2079 = vmatprep.subr.bf16.mxu0 0
    %2080 = vmatpush1.bf16.msra.mxu0 %v759
    %2081 = vmatprep.subr.bf16.mxu0 0
    %2082 = vmatpush1.bf16.msra.mxu0 0
    %2083 = vmatprep.subr.bf16.mxu0 0
    %2084 = vmatpush1.bf16.msra.mxu0 0
    %2085 = vmatprep.subr.bf16.mxu0 0
    %2086 = vmatpush1.bf16.msra.mxu0 0
    %2087 = vmatprep.subr.bf16.mxu0 0
    %2088 = vmatpush1.bf16.msra.mxu0 0
    %2089 = vmatprep.subr.bf16.mxu0 0
    %2090 = vmatpush1.bf16.msra.mxu0 0
    %2091 = vmatprep.subr.bf16.mxu0 0
    %2092 = vmatpush1.bf16.msra.mxu0 0
    %2093 = vmatprep.subr.bf16.mxu0 0
    %2094 = vmatpush1.bf16.msra.mxu0 0
    %2095 = vmatprep.subr.bf16.mxu0 0
    %2096 = vmatpush1.bf16.msra.mxu0 0
    %2097 = vmatprep.subr.bf16.mxu0 0
    %2098 = vmatpush1.bf16.msra.mxu0 0
    %2099 = vmatprep.subr.bf16.mxu0 0
    %2100 = vmatpush1.bf16.msra.mxu0 0
    %2101 = vmatprep.subr.bf16.mxu0 0
    %2102 = vmatpush1.bf16.msra.mxu0 0
    %2103 = vmatprep.subr.bf16.mxu0 0
    %2104 = vmatpush1.bf16.msra.mxu0 0
    %2105 = vmatprep.subr.bf16.mxu0 0
    %2106 = vmatpush1.bf16.msra.mxu0 0
    %2107 = vmatprep.subr.bf16.mxu0 0
    %2108 = vmatpush1.bf16.msra.mxu0 0
    %2109 = vmatprep.mubr.bf16.mxu0 0
    %2110 = vmatmul.mubr.bf16.gmra.mrb[0].mxu0 %v2075
    %v2111 = vpop.f32.mrb[0].mxu0
    %v2112 = vadd.f32 0.0, %v2111
    %v2113 = vpop.f32.mrb[0].mxu0
    %v2114 = vpop.f32.mrb[0].mxu0
    %v2115 = vpop.f32.mrb[0].mxu0
    %2116 = vdwg.mxu0
    %v2118 = vrot.slane %v2065, 1
    %v2119 = vrot.slane %v2065, 2
    %v2122 = vadd.f32 %v535, %v2118
    %v2123 = vadd.f32 %v538, %v2119
    %v2124 = vmul.f32 %v2122, %v558
    %v2125 = vmul.f32 %v2123, %v558
    %v2126 = vtanh.pop %v2124
    %v2127 = vtanh.pop %v2125
    %v2128 = vmul.f32 %v2126, %v558
    %v2129 = vmul.f32 %v2127, %v558
    %v2130 = vadd.f32 %v2128, %v559
    %v2131 = vadd.f32 %v2129, %v559
    %v2134 = vrot.slane %v1939, 7
    %v2135 = vrot.slane %v1940, 7
    %v2138 = vmul.f32 %v2130, %v2134
    %v2139 = vmul.f32 %v2131, %v2135
    %2142 = vrot.lane.b32.xlu0 %v2130, 64
    %v2143 = vpop.permute.xlu0 %2142
    %2144 = vrot.lane.b32.xlu0 %v2131, 64
    %v2145 = vpop.permute.xlu0 %2144
    %v2148 = vmul.f32 %v2130, %v2143
    %v2149 = vmul.f32 %v2131, %v2145
    %2152 = vrot.lane.b32.xlu0 %v2148, 32
    %v2153 = vpop.permute.xlu0 %2152
    %2154 = vrot.lane.b32.xlu0 %v2149, 32
    %v2155 = vpop.permute.xlu0 %2154
    %v2158 = vadd.f32 %v2138, %v2153
    %v2159 = vadd.f32 %v2139, %v2155
    %v2160 = vtanh.pop %v2158
    %v2161 = vtanh.pop %v2159
    %2164 = vrot.lane.b32.xlu0 %v2160, 64
    %v2165 = vpop.permute.xlu0 %2164
    %2166 = vrot.lane.b32.xlu0 %v2161, 64
    %v2167 = vpop.permute.xlu0 %2166
    %v2170 = vmul.f32 %v2130, %v2165
    %v2171 = vmul.f32 %v2131, %v2167
    %v2172 = vpack.c.bf16 %v2170, %v2170
    %v2173 = vpack.c.bf16 %v2171, %v2171
    %v2176 = vunpack.c.l.b16 %v2172
    %v2177 = vunpack.c.l.b16 %v2173
    %v2178 = vrot.slane %v2176, 7
    %v2179 = vrot.slane %v2177, 6
    %v2180 = vsel %vm613, %v2179, %v2178
    %v2181 = vpack.c.b16 %v2180, %v2180
    %2182 = vrot.lane.b32.xlu0 %v2181, 32
    %v2183 = vpop.permute.xlu0 %2182
    %v2185 = vsel %vm329, %v2183, 0
    %2187 = vmatprep.subr.bf16.mxu0 0
    %2188 = vmatpush1.bf16.msra.mxu0 %v626
    %2189 = vmatprep.subr.bf16.mxu0 0
    %2190 = vmatpush1.bf16.msra.mxu0 %v627
    %2191 = vmatprep.subr.bf16.mxu0 0
    %2192 = vmatpush1.bf16.msra.mxu0 0
    %2193 = vmatprep.subr.bf16.mxu0 0
    %2194 = vmatpush1.bf16.msra.mxu0 0
    %2195 = vmatprep.subr.bf16.mxu0 0
    %2196 = vmatpush1.bf16.msra.mxu0 0
    %2197 = vmatprep.subr.bf16.mxu0 0
    %2198 = vmatpush1.bf16.msra.mxu0 0
    %2199 = vmatprep.subr.bf16.mxu0 0
    %2200 = vmatpush1.bf16.msra.mxu0 0
    %2201 = vmatprep.subr.bf16.mxu0 0
    %2202 = vmatpush1.bf16.msra.mxu0 0
    %2203 = vmatprep.subr.bf16.mxu0 0
    %2204 = vmatpush1.bf16.msra.mxu0 0
    %2205 = vmatprep.subr.bf16.mxu0 0
    %2206 = vmatpush1.bf16.msra.mxu0 0
    %2207 = vmatprep.subr.bf16.mxu0 0
    %2208 = vmatpush1.bf16.msra.mxu0 0
    %2209 = vmatprep.subr.bf16.mxu0 0
    %2210 = vmatpush1.bf16.msra.mxu0 0
    %2211 = vmatprep.subr.bf16.mxu0 0
    %2212 = vmatpush1.bf16.msra.mxu0 0
    %2213 = vmatprep.subr.bf16.mxu0 0
    %2214 = vmatpush1.bf16.msra.mxu0 0
    %2215 = vmatprep.subr.bf16.mxu0 0
    %2216 = vmatpush1.bf16.msra.mxu0 0
    %2217 = vmatprep.subr.bf16.mxu0 0
    %2218 = vmatpush1.bf16.msra.mxu0 0
    %2219 = vmatprep.mubr.bf16.mxu0 0
    %2220 = vmatmul.mubr.bf16.gmra.mrb[0].mxu0 %v2185
    %v2221 = vpop.f32.mrb[0].mxu0
    %v2222 = vadd.f32 %v607, %v2221
    %v2223 = vpop.f32.mrb[0].mxu0
    %v2224 = vpop.f32.mrb[0].mxu0
    %v2225 = vpop.f32.mrb[0].mxu0
    %2226 = vdwg.mxu0
    %v2227 = vadd.f32 %v2222, %v2112
    %v2228 = vmul.f32 %v2227, %v558
    %v2229 = vtanh.pop %v2228
    %v2230 = vmul.f32 %v2229, %v558
    %v2231 = vadd.f32 %v2230, %v559
    %v2232 = vmul.f32 %v2231, %v2023
    %2234 = vrot.lane.b32.xlu0 %v2231, 64
    %v2235 = vpop.permute.xlu0 %2234
    %v2237 = vmul.f32 %v2231, %v2235
    %2239 = vrot.lane.b32.xlu0 %v2237, 32
    %v2240 = vpop.permute.xlu0 %2239
    %v2242 = vadd.f32 %v2232, %v2240
    %v2243 = vtanh.pop %v2242
    %2245 = vrot.lane.b32.xlu0 %v2243, 64
    %v2246 = vpop.permute.xlu0 %2245
    %v2248 = vmul.f32 %v2231, %v2246
    %v2249 = vld [vmem:[#allocation2 + $0x78] sm:$0xf]
    %v2250 = vld [vmem:[#allocation2 + $0x7c] sm:$0xf]
    %v2251 = vld [vmem:[#allocation2 + $0x80] sm:$0xf]
    %v2252 = vld [vmem:[#allocation2 + $0x84] sm:$0xf]
    %v2253 = vpack.c.bf16 %v2248, %v2248
    %v2254 = vlaneseq
    %v2255 = vshrl.u32 %v2254, 7
    %v2256 = vsub.s32 6, %v2255
    %v2257 = vrot.slane %v35, %v2256
    %2259 = vrot.lane.b32.xlu0 %v2253, 32
    %v2260 = vpop.permute.xlu0 %2259
    %v2265 = vunpack.c.l.b16 %v2249
    %v2266 = vunpack.c.l.b16 %v2250
    %v2267 = vunpack.c.l.b16 %v2251
    %v2268 = vunpack.c.l.b16 %v2252
    %v2269 = vpack.c.b16 %v2266, %v2265
    %v2270 = vpack.c.b16 %v2268, %v2267
    %v2274 = vsel %vm329, %v2260, 0
    %2276 = vmatprep.subr.bf16.mxu0 0
    %2277 = vmatpush1.bf16.msra.mxu0 %v2269
    %2278 = vmatprep.subr.bf16.mxu0 0
    %2279 = vmatpush1.bf16.msra.mxu0 %v2270
    %2280 = vmatprep.subr.bf16.mxu0 0
    %2281 = vmatpush1.bf16.msra.mxu0 0
    %2282 = vmatprep.subr.bf16.mxu0 0
    %2283 = vmatpush1.bf16.msra.mxu0 0
    %2284 = vmatprep.subr.bf16.mxu0 0
    %2285 = vmatpush1.bf16.msra.mxu0 0
    %2286 = vmatprep.subr.bf16.mxu0 0
    %2287 = vmatpush1.bf16.msra.mxu0 0
    %2288 = vmatprep.subr.bf16.mxu0 0
    %2289 = vmatpush1.bf16.msra.mxu0 0
    %2290 = vmatprep.subr.bf16.mxu0 0
    %2291 = vmatpush1.bf16.msra.mxu0 0
    %2292 = vmatprep.subr.bf16.mxu0 0
    %2293 = vmatpush1.bf16.msra.mxu0 0
    %2294 = vmatprep.subr.bf16.mxu0 0
    %2295 = vmatpush1.bf16.msra.mxu0 0
    %2296 = vmatprep.subr.bf16.mxu0 0
    %2297 = vmatpush1.bf16.msra.mxu0 0
    %2298 = vmatprep.subr.bf16.mxu0 0
    %2299 = vmatpush1.bf16.msra.mxu0 0
    %2300 = vmatprep.subr.bf16.mxu0 0
    %2301 = vmatpush1.bf16.msra.mxu0 0
    %2302 = vmatprep.subr.bf16.mxu0 0
    %2303 = vmatpush1.bf16.msra.mxu0 0
    %2304 = vmatprep.subr.bf16.mxu0 0
    %2305 = vmatpush1.bf16.msra.mxu0 0
    %2306 = vmatprep.subr.bf16.mxu0 0
    %2307 = vmatpush1.bf16.msra.mxu0 0
    %2308 = vmatprep.mubr.bf16.mxu0 0
    %2309 = vmatmul.mubr.bf16.gmra.mrb[0].mxu0 %v2274
    %v2310 = vpop.f32.mrb[0].mxu0
    %v2311 = vadd.f32 %v2257, %v2310
    %v2312 = vpop.f32.mrb[0].mxu0
    %v2313 = vpop.f32.mrb[0].mxu0
    %v2314 = vpop.f32.mrb[0].mxu0
    %2315 = vdwg.mxu0
    %v2316 = vtanh.pop %v2311
    %vm2317 = vcmask 1024
    %2318 = vst.msk [vmem:[%s3] sm:$0x3] %vm2317, %v2316
    // Predicated region
    $region18: #{lob_rnn_discrete_forward.1} parent=1 // pred_check
      _
    $region19: #{lob_rnn_discrete_forward.1} parent=1 // pred_check_branch
      %2320 = sbr.rel (0) target = $region21
    $region20: #{lob_rnn_discrete_forward.1} parent=1 // pred_region
      _
    $region21: #{lob_rnn_discrete_forward.1} parent=1 // pred_fallthru
      _
    // Predicated region
    $region22: #{lob_rnn_discrete_forward.1} parent=1 // pred_check
      _
    $region23: #{lob_rnn_discrete_forward.1} parent=1 // pred_check_branch
      %2322 = sbr.rel (0) target = $region25
    $region24: #{lob_rnn_discrete_forward.1} parent=1 // pred_region
      _
    $region25: #{lob_rnn_discrete_forward.1} parent=1 // pred_fallthru
      _
    %2323 = vsyncpa [#allocation3], 1

</llo_original>
